<compile_context>
chip_gen: v7x
topology: tpu7x:2x2x1
jax: 0.10.0
libtpu: 0.0.40
codegen_flags: <defaults>
</compile_context>

<pallas_src>
import jax
import jax.numpy as jnp
from jax.experimental import pallas as pl
from jax.experimental.pallas import tpu as pltpu


# ------------------------- kernel bodies (shared) -------------------------

def _conv_bn_pool_relu(patch, wconv, scale, shift):
    """patch: (4*S, Kp) im2col rows (4 pool phases x S pooled positions),
    wconv: (Kp, Cout).  Returns maxpool2x2(ReLU(BN(conv))) of shape (S, Cout)."""
    conv = jnp.dot(patch, wconv, preferred_element_type=jnp.float32)  # (4*S, Cout)
    y = conv * scale + shift            # BN (conv bias folded into shift)
    s = y.shape[0] // 4
    # 2x2 max-pool == max over the four conv phases of each pooled position.
    y = jnp.maximum(jnp.maximum(y[0 * s:1 * s], y[1 * s:2 * s]),
                    jnp.maximum(y[2 * s:3 * s], y[3 * s:4 * s]))
    return jnp.maximum(y, 0.0)          # ReLU (monotone, commutes with max)


def _mlp(flat, w1, b1, w2, b2):
    h = jnp.dot(flat, w1, preferred_element_type=jnp.float32) + b1
    return jnp.dot(h, w2, preferred_element_type=jnp.float32) + b2


def fused_net_kernel(patch_ref, wconv_ref, scale_ref, shift_ref,
                     w1_ref, b1_ref, w2_ref, b2_ref, o_ref):
    """Whole network for one image: conv+BN+ReLU+pool -> flatten -> fc1 -> fc2."""
    pooled = _conv_bn_pool_relu(patch_ref[...], wconv_ref[...],
                                scale_ref[...], shift_ref[...])      # (S, Cout)
    flat = pooled.reshape(1, pooled.shape[0] * pooled.shape[1])      # (1, S*Cout)
    out = _mlp(flat, w1_ref[...], b1_ref[...], w2_ref[...], b2_ref[...])
    o_ref[...] = out.astype(o_ref.dtype)


def conv_pool_kernel(patch_ref, wconv_ref, scale_ref, shift_ref, o_ref):
    o_ref[...] = _conv_bn_pool_relu(
        patch_ref[...], wconv_ref[...], scale_ref[...], shift_ref[...]
    ).astype(o_ref.dtype)


def mlp_kernel(x_ref, w1_ref, b1_ref, w2_ref, b2_ref, o_ref):
    o_ref[...] = _mlp(x_ref[...], w1_ref[...], b1_ref[...],
                      w2_ref[...], b2_ref[...]).astype(o_ref.dtype)


# ------------------------------ wrappers -----------------------------------

def prepare_params(params, channel_multiplier):
    """One-time weight prep: slice channels, fold BN, build the (Kp, Cout)
    im2col conv weight, permute fc1 columns for the NHWC-pooled flatten order,
    and pre-transpose fc1/fc2 so nothing is transposed per call."""
    conv_w = params["conv_w"]
    num_channels = int(channel_multiplier * conv_w.shape[0])
    w = conv_w[:num_channels]                    # (Cout, Cin, 3, 3)
    b = params["conv_b"][:num_channels]
    gamma = params["bn_gamma"][:num_channels]
    beta = params["bn_beta"][:num_channels]
    mean = params["bn_mean"][:num_channels]
    var = params["bn_var"][:num_channels]
    eps = params["bn_eps"]

    Cout, Cin = w.shape[0], w.shape[1]
    K = 9 * Cin
    Kp = ((K + 7) // 8) * 8                      # 27 -> 32

    scale = gamma / jnp.sqrt(var + eps)          # (Cout,)
    shift = (b - mean) * scale + beta            # conv bias folded into BN shift

    # (Cout, Cin, 3, 3) -> (kh, kw, cin, Cout) -> (9*Cin, Cout), zero-pad K->Kp.
    wconv = jnp.transpose(w, (2, 3, 1, 0)).reshape(K, Cout)
    wconv = jnp.pad(wconv, ((0, Kp - K), (0, 0)))

    fc1_w, fc1_b = params["fc1_w"], params["fc1_b"]   # (128, F), (128,)
    fc2_w, fc2_b = params["fc2_w"], params["fc2_b"]   # (10, 128), (10,)
    Fin, Hdim = fc1_w.shape[1], fc1_w.shape[0]
    assert Fin % Cout == 0, (Fin, Cout)
    S = Fin // Cout                                   # Hh*Wh pooled positions
    # Permute fc1 so flat[(h'*Wh+w')*Cout + c] hits the column PyTorch's NCHW
    # view uses for index c*Hh*Wh + h'*Wh + w'.  Done once, never per call.
    w1 = fc1_w.T.reshape(Cout, S, Hdim).transpose(1, 0, 2).reshape(Fin, Hdim)

    return {
        "num_channels": num_channels, "Kp": Kp, "S": S,
        "wconv": wconv,
        "scale": scale.reshape(1, Cout), "shift": shift.reshape(1, Cout),
        "w1": w1, "b1": fc1_b.reshape(1, Hdim),
        "w2": fc2_w.T, "b2": fc2_b.reshape(1, -1),
    }


def _im2col_pool_phases(x_nchw, Kp):
    """3x3/pad=1 im2col grouped by 2x2-pool phase.

    Returns (N, 4*Hh*Wh, Kp); row = phase*(Hh*Wh) + h'*Wh + w' with
    phase = dh*2 + dw, column = (kh*3+kw)*Cin + cin (zero-padded to Kp)."""
    N, Cin, H, W = x_nchw.shape
    Hh, Wh = H // 2, W // 2
    x = jnp.transpose(x_nchw, (0, 2, 3, 1))               # NHWC
    xp = jnp.pad(x, ((0, 0), (1, 1), (1, 1), (0, 0)))     # (N, H+2, W+2, Cin)
    phases = []
    for dh in (0, 1):
        for dw in (0, 1):
            taps = [xp[:, dh + kh:dh + kh + H:2, dw + kw:dw + kw + W:2, :]
                    for kh in range(3) for kw in range(3)]   # (N, Hh, Wh, Cin)
            phases.append(jnp.concatenate(taps, axis=-1))    # (N, Hh, Wh, 9*Cin)
    pat = jnp.stack(phases, axis=1).reshape(N, 4 * Hh * Wh, 9 * Cin)
    return jnp.pad(pat, ((0, 0), (0, 0), (0, Kp - 9 * Cin)))


def custom_net_forward(x_nchw, prep, *, fused=True):
    N = x_nchw.shape[0]
    patches = _im2col_pool_phases(x_nchw, prep["Kp"])      # (N, 4*S, Kp)
    M, Kp = patches.shape[1], patches.shape[2]
    Cout = prep["wconv"].shape[1]
    S = prep["S"]
    Fin, Hdim = prep["w1"].shape
    out_dim = prep["w2"].shape[1]
    par = pltpu.CompilerParams(dimension_semantics=("parallel",))

    if fused:
        return pl.pallas_call(
            fused_net_kernel,
            out_shape=jax.ShapeDtypeStruct((N, out_dim), jnp.float32),
            grid=(N,),
            in_specs=[
                pl.BlockSpec((None, M, Kp), lambda n: (n, 0, 0)),
                pl.BlockSpec((Kp, Cout), lambda n: (0, 0)),
                pl.BlockSpec((1, Cout), lambda n: (0, 0)),
                pl.BlockSpec((1, Cout), lambda n: (0, 0)),
                pl.BlockSpec((Fin, Hdim), lambda n: (0, 0)),
                pl.BlockSpec((1, Hdim), lambda n: (0, 0)),
                pl.BlockSpec((Hdim, out_dim), lambda n: (0, 0)),
                pl.BlockSpec((1, out_dim), lambda n: (0, 0)),
            ],
            out_specs=pl.BlockSpec((1, out_dim), lambda n: (n, 0)),
            compiler_params=par,
        )(patches, prep["wconv"], prep["scale"], prep["shift"],
          prep["w1"], prep["b1"], prep["w2"], prep["b2"])

    # Fallback split: conv/pool kernel -> XLA flatten (16 KB) -> MLP kernel.
    pooled = pl.pallas_call(
        conv_pool_kernel,
        out_shape=jax.ShapeDtypeStruct((N, S, Cout), jnp.float32),
        grid=(N,),
        in_specs=[
            pl.BlockSpec((None, M, Kp), lambda n: (n, 0, 0)),
            pl.BlockSpec((Kp, Cout), lambda n: (0, 0)),
            pl.BlockSpec((1, Cout), lambda n: (0, 0)),
            pl.BlockSpec((1, Cout), lambda n: (0, 0)),
        ],
        out_specs=pl.BlockSpec((None, S, Cout), lambda n: (n, 0, 0)),
        compiler_params=par,
    )(patches, prep["wconv"], prep["scale"], prep["shift"])
    flat = pooled.reshape(N, S * Cout)                 # NHWC-pooled flatten order
    return pl.pallas_call(
        mlp_kernel,
        out_shape=jax.ShapeDtypeStruct((N, out_dim), jnp.float32),
    )(flat, prep["w1"], prep["b1"], prep["w2"], prep["b2"])


def reference_forward(x_nchw, params, channel_multiplier):
    """Pure-JAX reference mirroring the PyTorch forward semantics."""
    conv_w = params["conv_w"]
    num_channels = int(channel_multiplier * conv_w.shape[0])
    w = conv_w[:num_channels]
    b = params["conv_b"][:num_channels]
    y = jax.lax.conv_general_dilated(
        x_nchw, w, window_strides=(1, 1), padding=((1, 1), (1, 1)),
        dimension_numbers=("NCHW", "OIHW", "NCHW"))
    y = y + b[None, :, None, None]
    mean = params["bn_mean"][:num_channels][None, :, None, None]
    var = params["bn_var"][:num_channels][None, :, None, None]
    gamma = params["bn_gamma"][:num_channels][None, :, None, None]
    beta = params["bn_beta"][:num_channels][None, :, None, None]
    y = (y - mean) / jnp.sqrt(var + params["bn_eps"]) * gamma + beta
    y = jnp.maximum(y, 0.0)
    y = jax.lax.reduce_window(y, -jnp.inf, jax.lax.max,
                              (1, 1, 2, 2), (1, 1, 2, 2), "VALID")
    flat = y.reshape(y.shape[0], -1)
    h = flat @ params["fc1_w"].T + params["fc1_b"]
    return h @ params["fc2_w"].T + params["fc2_b"]


if __name__ == "__main__":
    key = jax.random.PRNGKey(0)
    ks = jax.random.split(key, 11)

    N, Cin, H, W = 2, 3, 16, 16
    Cout = 32
    channel_multiplier = 1.0
    num_channels = int(channel_multiplier * Cout)
    F = num_channels * (H // 2) * (W // 2)   # fc1 in-features, as forward() computes

    # TODO(synk): the PyTorch forward re-creates fc1 with fresh random weights on
    # every call; here fc1 is initialized once, deterministically.
    params = {
        "conv_w": 0.1 * jax.random.normal(ks[0], (Cout, Cin, 3, 3), jnp.float32),
        "conv_b": 0.1 * jax.random.normal(ks[1], (Cout,), jnp.float32),
        "bn_gamma": 1.0 + 0.1 * jax.random.normal(ks[2], (Cout,), jnp.float32),
        "bn_beta": 0.1 * jax.random.normal(ks[3], (Cout,), jnp.float32),
        "bn_mean": 0.1 * jax.random.normal(ks[4], (Cout,), jnp.float32),
        "bn_var": jax.random.uniform(ks[5], (Cout,), jnp.float32, 0.5, 1.5),
        "bn_eps": 1e-5,
        "fc1_w": jax.random.normal(ks[6], (128, F), jnp.float32) / (float(F) ** 0.5),
        "fc1_b": 0.1 * jax.random.normal(ks[7], (128,), jnp.float32),
        "fc2_w": jax.random.normal(ks[8], (10, 128), jnp.float32) / (128.0 ** 0.5),
        "fc2_b": 0.1 * jax.random.normal(ks[9], (10,), jnp.float32),
    }
    x = jax.random.normal(ks[10], (N, Cin, H, W), jnp.float32)

    prep = prepare_params(params, channel_multiplier)
    ref = reference_forward(x, params, channel_multiplier)

    def run_and_check(fused):
        fwd = jax.jit(lambda inp: custom_net_forward(inp, prep, fused=fused))
        out = jax.block_until_ready(fwd(x))
        assert out.shape == (N, 10), out.shape
        # 5e-3: allow for MXU default-precision f32 matmul differences vs XLA ref.
        assert jnp.allclose(out, ref, atol=5e-3, rtol=5e-3)
        return out

    try:
        out = run_and_check(fused=True)
    except Exception:
        # TODO(synk): if this Mosaic version rejects the in-kernel (S,Cout)->(1,S*Cout)
        # flatten, fall back to the two-kernel split (XLA does the 16 KB flatten).
        out = run_and_check(fused=False)

    print("KERNEL_OK")
</pallas_src>

<mosaic_0001>
module attributes {stable_mosaic.version = 11 : i64} {
  func.func @conv_pool_kernel(%arg0: i32, %arg1: memref<1x256x32xf32, #tpu.memory_space<vmem>>, %arg2: memref<32x32xf32, #tpu.memory_space<vmem>>, %arg3: memref<1x32xf32, #tpu.memory_space<vmem>>, %arg4: memref<1x32xf32, #tpu.memory_space<vmem>>, %arg5: memref<1x64x32xf32, #tpu.memory_space<vmem>>) attributes {dimension_semantics = [#tpu.dimension_semantics<parallel>], iteration_bounds = array<i64: 2>, scalar_prefetch = 0 : i64, scratch_operands = 0 : i64, tpu.core_type = #tpu.core_type<tc>, window_params = [{transform_indices = @transform_0, window_bounds = array<i64: 1, 256, 32>}, {pipeline_mode = #tpu.pipeline_mode<synchronous>, transform_indices = @transform_1, window_bounds = array<i64: 32, 32>}, {pipeline_mode = #tpu.pipeline_mode<synchronous>, transform_indices = @transform_2, window_bounds = array<i64: 1, 32>}, {pipeline_mode = #tpu.pipeline_mode<synchronous>, transform_indices = @transform_3, window_bounds = array<i64: 1, 32>}, {transform_indices = @transform_4, window_bounds = array<i64: 1, 64, 32>}]} {
    %c0 = arith.constant 0 : index
    %c0_0 = arith.constant 0 : index
    %c0_1 = arith.constant 0 : index
    %0 = vector.load %arg1[%c0, %c0_0, %c0_1] : memref<1x256x32xf32, #tpu.memory_space<vmem>>, vector<1x256x32xf32>
    %1 = vector.shape_cast %0 : vector<1x256x32xf32> to vector<256x32xf32>
    %c0_2 = arith.constant 0 : index
    %c0_3 = arith.constant 0 : index
    %2 = vector.load %arg2[%c0_2, %c0_3] : memref<32x32xf32, #tpu.memory_space<vmem>>, vector<32x32xf32>
    %c0_4 = arith.constant 0 : index
    %c0_5 = arith.constant 0 : index
    %3 = vector.load %arg3[%c0_4, %c0_5] : memref<1x32xf32, #tpu.memory_space<vmem>>, vector<1x32xf32>
    %c0_6 = arith.constant 0 : index
    %c0_7 = arith.constant 0 : index
    %4 = vector.load %arg4[%c0_6, %c0_7] : memref<1x32xf32, #tpu.memory_space<vmem>>, vector<1x32xf32>
    %cst = arith.constant dense<0.000000e+00> : vector<256x32xf32>
    %5 = tpu.matmul %1, %2, %cst {dimension_numbers = #tpu.dot_dimension_numbers<[1], [0], [0], [1], [0, 0, 1, 1], [], []>} : vector<256x32xf32>, vector<32x32xf32>, vector<256x32xf32> -> vector<256x32xf32>
    %6 = vector.broadcast %3 : vector<1x32xf32> to vector<256x32xf32>
    %7 = arith.mulf %5, %6 : vector<256x32xf32>
    %8 = vector.broadcast %4 : vector<1x32xf32> to vector<256x32xf32>
    %9 = arith.addf %7, %8 : vector<256x32xf32>
    %10 = vector.extract_strided_slice %9 {offsets = [0, 0], sizes = [64, 32], strides = [1, 1]} : vector<256x32xf32> to vector<64x32xf32>
    %11 = vector.extract_strided_slice %9 {offsets = [64, 0], sizes = [64, 32], strides = [1, 1]} : vector<256x32xf32> to vector<64x32xf32>
    %12 = arith.maximumf %10, %11 : vector<64x32xf32>
    %13 = vector.extract_strided_slice %9 {offsets = [128, 0], sizes = [64, 32], strides = [1, 1]} : vector<256x32xf32> to vector<64x32xf32>
    %14 = vector.extract_strided_slice %9 {offsets = [192, 0], sizes = [64, 32], strides = [1, 1]} : vector<256x32xf32> to vector<64x32xf32>
    %15 = arith.maximumf %13, %14 : vector<64x32xf32>
    %16 = arith.maximumf %12, %15 : vector<64x32xf32>
    %cst_8 = arith.constant 0.000000e+00 : f32
    %17 = vector.broadcast %cst_8 : f32 to vector<64x32xf32>
    %18 = arith.maximumf %16, %17 : vector<64x32xf32>
    %c0_9 = arith.constant 0 : index
    %c0_10 = arith.constant 0 : index
    %c0_11 = arith.constant 0 : index
    %19 = vector.load %arg5[%c0_9, %c0_10, %c0_11] : memref<1x64x32xf32, #tpu.memory_space<vmem>>, vector<1x64x32xf32>
    %20 = vector.shape_cast %19 : vector<1x64x32xf32> to vector<64x32xf32>
    %21 = vector.shape_cast %18 : vector<64x32xf32> to vector<1x64x32xf32>
    tpu.vector_store %arg5[%c0_9, %c0_10, %c0_11], %21 {strides = array<i32>} : memref<1x64x32xf32, #tpu.memory_space<vmem>>, vector<1x64x32xf32>,
    return
  }
  func.func @transform_0(%arg0: i32) -> (i32, i32, i32) {
    %c0_i32 = arith.constant 0 : i32
    %c0_i32_0 = arith.constant 0 : i32
    %c0_i32_1 = arith.constant 0 : i32
    return %arg0, %c0_i32, %c0_i32_0 : i32, i32, i32
  }
  func.func @transform_1(%arg0: i32) -> (i32, i32) {
    %c0_i32 = arith.constant 0 : i32
    %c0_i32_0 = arith.constant 0 : i32
    %c0_i32_1 = arith.constant 0 : i32
    return %c0_i32, %c0_i32_0 : i32, i32
  }
  func.func @transform_2(%arg0: i32) -> (i32, i32) {
    %c0_i32 = arith.constant 0 : i32
    %c0_i32_0 = arith.constant 0 : i32
    %c0_i32_1 = arith.constant 0 : i32
    return %c0_i32, %c0_i32_0 : i32, i32
  }
  func.func @transform_3(%arg0: i32) -> (i32, i32) {
    %c0_i32 = arith.constant 0 : i32
    %c0_i32_0 = arith.constant 0 : i32
    %c0_i32_1 = arith.constant 0 : i32
    return %c0_i32, %c0_i32_0 : i32, i32
  }
  func.func @transform_4(%arg0: i32) -> (i32, i32, i32) {
    %c0_i32 = arith.constant 0 : i32
    %c0_i32_0 = arith.constant 0 : i32
    %c0_i32_1 = arith.constant 0 : i32
    return %arg0, %c0_i32, %c0_i32_0 : i32, i32, i32
  }
}

module attributes {stable_mosaic.version = 11 : i64} {
  func.func @mlp_kernel(%arg0: memref<2x2048xf32, #tpu.memory_space<vmem>>, %arg1: memref<2048x128xf32, #tpu.memory_space<vmem>>, %arg2: memref<1x128xf32, #tpu.memory_space<vmem>>, %arg3: memref<128x10xf32, #tpu.memory_space<vmem>>, %arg4: memref<1x10xf32, #tpu.memory_space<vmem>>, %arg5: memref<2x10xf32, #tpu.memory_space<vmem>>) attributes {dimension_semantics = [], scalar_prefetch = 0 : i64, scratch_operands = 0 : i64, tpu.core_type = #tpu.core_type<tc>} {
    %c0 = arith.constant 0 : index
    %c0_0 = arith.constant 0 : index
    %0 = vector.load %arg0[%c0, %c0_0] : memref<2x2048xf32, #tpu.memory_space<vmem>>, vector<2x2048xf32>
    %c0_1 = arith.constant 0 : index
    %c0_2 = arith.constant 0 : index
    %1 = vector.load %arg1[%c0_1, %c0_2] : memref<2048x128xf32, #tpu.memory_space<vmem>>, vector<2048x128xf32>
    %c0_3 = arith.constant 0 : index
    %c0_4 = arith.constant 0 : index
    %2 = vector.load %arg2[%c0_3, %c0_4] : memref<1x128xf32, #tpu.memory_space<vmem>>, vector<1x128xf32>
    %c0_5 = arith.constant 0 : index
    %c0_6 = arith.constant 0 : index
    %3 = vector.load %arg3[%c0_5, %c0_6] : memref<128x10xf32, #tpu.memory_space<vmem>>, vector<128x10xf32>
    %c0_7 = arith.constant 0 : index
    %c0_8 = arith.constant 0 : index
    %4 = vector.load %arg4[%c0_7, %c0_8] : memref<1x10xf32, #tpu.memory_space<vmem>>, vector<1x10xf32>
    %cst = arith.constant dense<0.000000e+00> : vector<2x128xf32>
    %5 = tpu.matmul %0, %1, %cst {dimension_numbers = #tpu.dot_dimension_numbers<[1], [0], [0], [1], [0, 0, 1, 1], [], []>} : vector<2x2048xf32>, vector<2048x128xf32>, vector<2x128xf32> -> vector<2x128xf32>
    %6 = vector.broadcast %2 : vector<1x128xf32> to vector<2x128xf32>
    %7 = arith.addf %5, %6 : vector<2x128xf32>
    %cst_9 = arith.constant dense<0.000000e+00> : vector<2x10xf32>
    %8 = tpu.matmul %7, %3, %cst_9 {dimension_numbers = #tpu.dot_dimension_numbers<[1], [0], [0], [1], [0, 0, 1, 1], [], []>} : vector<2x128xf32>, vector<128x10xf32>, vector<2x10xf32> -> vector<2x10xf32>
    %9 = vector.broadcast %4 : vector<1x10xf32> to vector<2x10xf32>
    %10 = arith.addf %8, %9 : vector<2x10xf32>
    %c0_10 = arith.constant 0 : index
    %c0_11 = arith.constant 0 : index
    %11 = vector.load %arg5[%c0_10, %c0_11] : memref<2x10xf32, #tpu.memory_space<vmem>>, vector<2x10xf32>
    tpu.vector_store %arg5[%c0_10, %c0_11], %10 {strides = array<i32>} : memref<2x10xf32, #tpu.memory_space<vmem>>, vector<2x10xf32>,
    return
  }
}

</mosaic_0001>

<llo_original>
// kernel: _lambda_.2
$region0: #{_lambda_.2}
  #allocation0 [shape = 'u32[]', space=smem, size = 0x4, offset = 0x4, fixed_abs, tag = 'smem constant byte address 0x4 - core index']
  #allocation1 [shape = 'u32[144,128]{1,0:T(1,128)}', space=vmem, size = 0x12000, scoped, tag = 'internal scratch']
  %s0 = inlined_call_operand.vmem [shape: f32[2,256,32], index: 0, kind: input, shape index: {}]
  %s1 = inlined_call_operand.vmem [shape: f32[32,32], index: 1, kind: input, shape index: {}]
  %s2 = inlined_call_operand.vmem [shape: f32[1,32], index: 2, kind: input, shape index: {}]
  %s3 = inlined_call_operand.vmem [shape: f32[1,32], index: 3, kind: input, shape index: {}]
  %s4 = inlined_call_operand.vmem [shape: f32[2,64,32], index: 4, kind: output, shape index: {}]
  %s5 = sld [smem:[#allocation0]]
  $region49: #{_lambda_.2} parent=0
    _
  %s7 = ssub.s32 1, %s5
  %s8 = scalar_select 0, %s7, %s5
  loop: start=0, step=1, limit=4
  $region2: #{_lambda_.2} parent=0 // loop_pre_header
    _
  $region3: #{_lambda_.2} parent=0 // loop_header
    %s10 = sphi 0, %s14
    %p11 = scmp.ge.s32.totalorder %s10, 4
    %s20 = sphi 0, %s22
    %s23 = sphi 0, %s20
    %s24 = sphi 0, %s23
    %s40 = sphi 0, %s24
    %s44 = sphi 0, %s44
    %s46 = sphi 0, %s44
    %s47 = sphi 0, %s46
    %s61 = sphi 0, %s47
    %s65 = sphi 0, %s65
    %s67 = sphi 0, %s65
    %s68 = sphi 0, %s67
    %s82 = sphi 0, %s68
    %s86 = sphi 0, %s86
    %s88 = sphi 0, %s86
    %s89 = sphi 0, %s88
    %s103 = sphi 0, %s89
    %s109 = sphi 0, %s111
    %s112 = sphi 0, %s109
    %s113 = sphi 0, %s112
    %s129 = sphi 0, %s113
  $region4: #{_lambda_.2} parent=0 // loop_header_branch
    %13 = sbr.rel (%p11) target = $region8
  $region5: #{_lambda_.2} parent=0 // loop_body
    %s15 = ssub.s32 %s10, 1
    %s16 = ssub.s32 %s10, 2
    %s17 = sadd.s32 %s10, 1
    %s18 = ssub.s32 %s10, %s17
    %p19 = scmp.eq.s32.totalorder %s18, 0
    %s21 = sadd.s32 %s20, 1
    %s22 = scalar_select %p19, %s20, %s21
    %p25 = pneg %p19
    %p26 = scmp.eq.s32.totalorder %s10, 1
    %p27 = por %p25, %p26
    %p28 = scmp.ne.s32.totalorder %s20, %s23
    %p29 = scmp.eq.s32.totalorder %s10, 0
    %p30 = por %p28, %p29
    %p31 = scmp.ne.s32.totalorder %s20, %s23
    %p32 = scmp.eq.s32.totalorder %s15, 1
    %p33 = por %p31, %p32
    %p34 = scmp.ne.s32.totalorder %s23, %s24
    %p35 = scmp.eq.s32.totalorder %s15, 0
    %p36 = por %p34, %p35
    %p37 = scmp.ne.s32.totalorder %s23, %s24
    %p38 = scmp.eq.s32.totalorder %s16, 1
    %p39 = por %p37, %p38
    %p41 = scmp.ne.s32.totalorder %s24, %s40
    %p42 = scmp.eq.s32.totalorder %s16, 0
    %p43 = por %p41, %p42
    %s45 = sadd.s32 %s44, 1
    %p48 = scmp.eq.s32.totalorder %s10, 1
    %p49 = scmp.ne.s32.totalorder %s44, %s46
    %p50 = scmp.eq.s32.totalorder %s10, 0
    %p51 = por %p49, %p50
    %p52 = scmp.ne.s32.totalorder %s44, %s46
    %p53 = scmp.eq.s32.totalorder %s15, 1
    %p54 = por %p52, %p53
    %p55 = scmp.ne.s32.totalorder %s46, %s47
    %p56 = scmp.eq.s32.totalorder %s15, 0
    %p57 = por %p55, %p56
    %p58 = scmp.ne.s32.totalorder %s46, %s47
    %p59 = scmp.eq.s32.totalorder %s16, 1
    %p60 = por %p58, %p59
    %p62 = scmp.ne.s32.totalorder %s47, %s61
    %p63 = scmp.eq.s32.totalorder %s16, 0
    %p64 = por %p62, %p63
    %s66 = sadd.s32 %s65, 1
    %p69 = scmp.eq.s32.totalorder %s10, 1
    %p70 = scmp.ne.s32.totalorder %s65, %s67
    %p71 = scmp.eq.s32.totalorder %s10, 0
    %p72 = por %p70, %p71
    %p73 = scmp.ne.s32.totalorder %s65, %s67
    %p74 = scmp.eq.s32.totalorder %s15, 1
    %p75 = por %p73, %p74
    %p76 = scmp.ne.s32.totalorder %s67, %s68
    %p77 = scmp.eq.s32.totalorder %s15, 0
    %p78 = por %p76, %p77
    %p79 = scmp.ne.s32.totalorder %s67, %s68
    %p80 = scmp.eq.s32.totalorder %s16, 1
    %p81 = por %p79, %p80
    %p83 = scmp.ne.s32.totalorder %s68, %s82
    %p84 = scmp.eq.s32.totalorder %s16, 0
    %p85 = por %p83, %p84
    %s87 = sadd.s32 %s86, 1
    %p90 = scmp.eq.s32.totalorder %s10, 1
    %p91 = scmp.ne.s32.totalorder %s86, %s88
    %p92 = scmp.eq.s32.totalorder %s10, 0
    %p93 = por %p91, %p92
    %p94 = scmp.ne.s32.totalorder %s86, %s88
    %p95 = scmp.eq.s32.totalorder %s15, 1
    %p96 = por %p94, %p95
    %p97 = scmp.ne.s32.totalorder %s88, %s89
    %p98 = scmp.eq.s32.totalorder %s15, 0
    %p99 = por %p97, %p98
    %p100 = scmp.ne.s32.totalorder %s88, %s89
    %p101 = scmp.eq.s32.totalorder %s16, 1
    %p102 = por %p100, %p101
    %p104 = scmp.ne.s32.totalorder %s89, %s103
    %p105 = scmp.eq.s32.totalorder %s16, 0
    %p106 = por %p104, %p105
    %s107 = ssub.s32 %s10, %s17
    %p108 = scmp.eq.s32.totalorder %s107, 0
    %s110 = sadd.s32 %s109, 1
    %s111 = scalar_select %p108, %s109, %s110
    %p114 = pneg %p108
    %p115 = scmp.eq.s32.totalorder %s10, 1
    %p116 = por %p114, %p115
    %p117 = scmp.ne.s32.totalorder %s109, %s112
    %p118 = scmp.eq.s32.totalorder %s10, 0
    %p119 = por %p117, %p118
    %p120 = scmp.ne.s32.totalorder %s109, %s112
    %p121 = scmp.eq.s32.totalorder %s15, 1
    %p122 = por %p120, %p121
    %p123 = scmp.ne.s32.totalorder %s112, %s113
    %p124 = scmp.eq.s32.totalorder %s15, 0
    %p125 = por %p123, %p124
    %p126 = scmp.ne.s32.totalorder %s112, %s113
    %p127 = scmp.eq.s32.totalorder %s16, 1
    %p128 = por %p126, %p127
    %p130 = scmp.ne.s32.totalorder %s113, %s129
    %p131 = scmp.eq.s32.totalorder %s16, 0
    %p132 = por %p130, %p131
    %p133 = scmp.le.s32.totalorder 1, %s10
    %p134 = scmp.lt.s32.totalorder %s10, 3
    %p135 = pnand %p133, %p134
    %p136 = pneg %p135
    // Predicated region
    $region9: #{_lambda_.2} parent=5 // pred_check
      _
    $region10: #{_lambda_.2} parent=5 // pred_check_branch
      %138 = sbr.rel (%p135) target = $region12
    $region11: #{_lambda_.2} parent=5 // pred_region
      %s139 = ssub.s32 %s10, 1
      // Predicated region
      $region13: #{_lambda_.2} parent=11 // pred_check
        %p140 = pneg %p57
      $region14: #{_lambda_.2} parent=11 // pred_check_branch
        %142 = sbr.rel (%p140) target = $region16
      $region15: #{_lambda_.2} parent=11 // pred_region
        _
      $region16: #{_lambda_.2} parent=11 // pred_fallthru
        _
      // Predicated region
      $region17: #{_lambda_.2} parent=11 // pred_check
        %p143 = pneg %p78
      $region18: #{_lambda_.2} parent=11 // pred_check_branch
        %145 = sbr.rel (%p143) target = $region20
      $region19: #{_lambda_.2} parent=11 // pred_region
        _
      $region20: #{_lambda_.2} parent=11 // pred_fallthru
        _
      // Predicated region
      $region21: #{_lambda_.2} parent=11 // pred_check
        %p146 = pneg %p99
      $region22: #{_lambda_.2} parent=11 // pred_check_branch
        %148 = sbr.rel (%p146) target = $region24
      $region23: #{_lambda_.2} parent=11 // pred_region
        _
      $region24: #{_lambda_.2} parent=11 // pred_fallthru
        _
    $region12: #{_lambda_.2} parent=5 // pred_fallthru
      _
    %p149 = scmp.lt.s32.totalorder %s10, 2
    // Predicated region
    $region25: #{_lambda_.2} parent=5 // pred_check
      %p150 = pneg %p149
    $region26: #{_lambda_.2} parent=5 // pred_check_branch
      %152 = sbr.rel (%p150) target = $region28
    $region27: #{_lambda_.2} parent=5 // pred_region
      // Predicated region
      $region29: #{_lambda_.2} parent=27 // pred_check
        %p153 = pneg %p30
      $region30: #{_lambda_.2} parent=27 // pred_check_branch
        %155 = sbr.rel (%p153) target = $region32
      $region31: #{_lambda_.2} parent=27 // pred_region
        %p156 = scmp.lt.s32.totalorder %s10, 1
        %s157 = scalar_select %p156, %s10, 1
        %s158 = smul.addr %s157, 32
        %s159 = smul.addr %s158, 8
        %s160 = scalar_lea.vmem %s0, %s159
      $region32: #{_lambda_.2} parent=27 // pred_fallthru
        _
    $region28: #{_lambda_.2} parent=5 // pred_fallthru
      _
    %p161 = scmp.le.s32.totalorder 1, %s10
    %p162 = scmp.lt.s32.totalorder %s10, 3
    %p163 = pnand %p161, %p162
    %p164 = pneg %p163
    // Predicated region
    $region33: #{_lambda_.2} parent=5 // pred_check
      _
    $region34: #{_lambda_.2} parent=5 // pred_check_branch
      %166 = sbr.rel (%p163) target = $region36
    $region35: #{_lambda_.2} parent=5 // pred_region
      %s167 = ssub.s32 %s10, 1
      %p168 = scmp.lt.s32.totalorder %s15, 1
      %s169 = scalar_select %p168, %s15, 1
      %s170 = smul.addr %s169, 32
      %s171 = smul.addr %s170, 8
      %s172 = scalar_lea.vmem %s0, %s171
      %p173 = pneg %p36
      %p174 = pneg %p33
      %p175 = pneg %p57
      %p176 = pneg %p54
      %p177 = pneg %p78
      %p178 = pneg %p75
      %p179 = pneg %p99
      %p180 = pneg %p96
      %p181 = pneg %p125
      %p182 = pneg %p122
      %p183 = scmp.lt.s32.totalorder %s15, 1
      %s184 = scalar_select %p183, %s15, 1
      %s185 = smul.addr %s184, 8
      %s186 = smul.addr %s185, 8
      %s187 = scalar_lea.vmem %s4, %s186
      %p188 = scmp.lt.s32.totalorder %s15, 1
      %s189 = scalar_select %p188, %s15, 1
      %s190 = smul.addr %s189, 32
      %s191 = smul.addr %s190, 8
      %s192 = scalar_lea.vmem %s0, %s191
      %p193 = scmp.lt.s32.totalorder %s15, 1
      %s194 = scalar_select %p193, %s15, 1
      %s195 = smul.addr %s194, 8
      %s196 = smul.addr %s195, 8
      %s197 = scalar_lea.vmem %s4, %s196
      %v198 = vld [vmem:[%s192] sm:$0xff]
      %v199 = vld [vmem:[%s192 + $0x8] sm:$0xff]
      %v200 = vld [vmem:[%s192 + $0x10] sm:$0xff]
      %v201 = vld [vmem:[%s192 + $0x18] sm:$0xff]
      %v202 = vld [vmem:[%s192 + $0x20] sm:$0xff]
      %v203 = vld [vmem:[%s192 + $0x28] sm:$0xff]
      %v204 = vld [vmem:[%s192 + $0x30] sm:$0xff]
      %v205 = vld [vmem:[%s192 + $0x38] sm:$0xff]
      %v206 = vld [vmem:[%s192 + $0x40] sm:$0xff]
      %v207 = vld [vmem:[%s192 + $0x48] sm:$0xff]
      %v208 = vld [vmem:[%s192 + $0x50] sm:$0xff]
      %v209 = vld [vmem:[%s192 + $0x58] sm:$0xff]
      %v210 = vld [vmem:[%s192 + $0x60] sm:$0xff]
      %v211 = vld [vmem:[%s192 + $0x68] sm:$0xff]
      %v212 = vld [vmem:[%s192 + $0x70] sm:$0xff]
      %v213 = vld [vmem:[%s192 + $0x78] sm:$0xff]
      %v214 = vld [vmem:[%s192 + $0x80] sm:$0xff]
      %v215 = vld [vmem:[%s192 + $0x88] sm:$0xff]
      %v216 = vld [vmem:[%s192 + $0x90] sm:$0xff]
      %v217 = vld [vmem:[%s192 + $0x98] sm:$0xff]
      %v218 = vld [vmem:[%s192 + $0xa0] sm:$0xff]
      %v219 = vld [vmem:[%s192 + $0xa8] sm:$0xff]
      %v220 = vld [vmem:[%s192 + $0xb0] sm:$0xff]
      %v221 = vld [vmem:[%s192 + $0xb8] sm:$0xff]
      %v222 = vld [vmem:[%s192 + $0xc0] sm:$0xff]
      %v223 = vld [vmem:[%s192 + $0xc8] sm:$0xff]
      %v224 = vld [vmem:[%s192 + $0xd0] sm:$0xff]
      %v225 = vld [vmem:[%s192 + $0xd8] sm:$0xff]
      %v226 = vld [vmem:[%s192 + $0xe0] sm:$0xff]
      %v227 = vld [vmem:[%s192 + $0xe8] sm:$0xff]
      %v228 = vld [vmem:[%s192 + $0xf0] sm:$0xff]
      %v229 = vld [vmem:[%s192 + $0xf8] sm:$0xff]
      %v230 = vld [vmem:[%s1] sm:$0xff]
      %v231 = vld [vmem:[%s1 + $0x8] sm:$0xff]
      %v232 = vld [vmem:[%s1 + $0x10] sm:$0xff]
      %v233 = vld [vmem:[%s1 + $0x18] sm:$0xff]
      %v234 = vld [vmem:[%s2] sm:$0x1]
      %v235 = vld [vmem:[%s3] sm:$0x1]
      %vm236 = vcmask 261120
      %v238 = vsel %vm236, %v198, 0
      %v241 = vsel %vm236, %v199, 0
      %v244 = vsel %vm236, %v200, 0
      %v247 = vsel %vm236, %v201, 0
      %v250 = vsel %vm236, %v202, 0
      %v253 = vsel %vm236, %v203, 0
      %v256 = vsel %vm236, %v204, 0
      %v259 = vsel %vm236, %v205, 0
      %v262 = vsel %vm236, %v206, 0
      %v265 = vsel %vm236, %v207, 0
      %v268 = vsel %vm236, %v208, 0
      %v271 = vsel %vm236, %v209, 0
      %v274 = vsel %vm236, %v210, 0
      %v277 = vsel %vm236, %v211, 0
      %v280 = vsel %vm236, %v212, 0
      %v283 = vsel %vm236, %v213, 0
      %v286 = vsel %vm236, %v214, 0
      %v289 = vsel %vm236, %v215, 0
      %v292 = vsel %vm236, %v216, 0
      %v295 = vsel %vm236, %v217, 0
      %v298 = vsel %vm236, %v218, 0
      %v301 = vsel %vm236, %v219, 0
      %v304 = vsel %vm236, %v220, 0
      %v307 = vsel %vm236, %v221, 0
      %v310 = vsel %vm236, %v222, 0
      %v313 = vsel %vm236, %v223, 0
      %v316 = vsel %vm236, %v224, 0
      %v319 = vsel %vm236, %v225, 0
      %v322 = vsel %vm236, %v226, 0
      %v325 = vsel %vm236, %v227, 0
      %v328 = vsel %vm236, %v228, 0
      %v331 = vsel %vm236, %v229, 0
      %333 = vmatprep.subr.mxu0 0.0
      %334 = vmatpush1.msra.mxu0 %v230
      %335 = vmatprep.subr.mxu0 0.0
      %336 = vmatpush1.msra.mxu0 %v231
      %337 = vmatprep.subr.mxu0 0.0
      %338 = vmatpush1.msra.mxu0 %v232
      %339 = vmatprep.subr.mxu0 0.0
      %340 = vmatpush1.msra.mxu0 %v233
      %341 = vmatprep.subr.mxu0 0.0
      %342 = vmatpush1.msra.mxu0 0.0
      %343 = vmatprep.subr.mxu0 0.0
      %344 = vmatpush1.msra.mxu0 0.0
      %345 = vmatprep.subr.mxu0 0.0
      %346 = vmatpush1.msra.mxu0 0.0
      %347 = vmatprep.subr.mxu0 0.0
      %348 = vmatpush1.msra.mxu0 0.0
      %349 = vmatprep.subr.mxu0 0.0
      %350 = vmatpush1.msra.mxu0 0.0
      %351 = vmatprep.subr.mxu0 0.0
      %352 = vmatpush1.msra.mxu0 0.0
      %353 = vmatprep.subr.mxu0 0.0
      %354 = vmatpush1.msra.mxu0 0.0
      %355 = vmatprep.subr.mxu0 0.0
      %356 = vmatpush1.msra.mxu0 0.0
      %357 = vmatprep.subr.mxu0 0.0
      %358 = vmatpush1.msra.mxu0 0.0
      %359 = vmatprep.subr.mxu0 0.0
      %360 = vmatpush1.msra.mxu0 0.0
      %361 = vmatprep.subr.mxu0 0.0
      %362 = vmatpush1.msra.mxu0 0.0
      %363 = vmatprep.subr.mxu0 0.0
      %364 = vmatpush1.msra.mxu0 0.0
      %365 = vmatprep.subr.mxu0 0.0
      %366 = vmatpush1.msra.mxu0 0.0
      %367 = vmatprep.subr.mxu0 0.0
      %368 = vmatpush1.msra.mxu0 0.0
      %369 = vmatprep.subr.mxu0 0.0
      %370 = vmatpush1.msra.mxu0 0.0
      %371 = vmatprep.subr.mxu0 0.0
      %372 = vmatpush1.msra.mxu0 0.0
      %373 = vmatprep.subr.mxu0 0.0
      %374 = vmatpush1.msra.mxu0 0.0
      %375 = vmatprep.subr.mxu0 0.0
      %376 = vmatpush1.msra.mxu0 0.0
      %377 = vmatprep.subr.mxu0 0.0
      %378 = vmatpush1.msra.mxu0 0.0
      %379 = vmatprep.subr.mxu0 0.0
      %380 = vmatpush1.msra.mxu0 0.0
      %381 = vmatprep.subr.mxu0 0.0
      %382 = vmatpush1.msra.mxu0 0.0
      %383 = vmatprep.subr.mxu0 0.0
      %384 = vmatpush1.msra.mxu0 0.0
      %385 = vmatprep.subr.mxu0 0.0
      %386 = vmatpush1.msra.mxu0 0.0
      %387 = vmatprep.subr.mxu0 0.0
      %388 = vmatpush1.msra.mxu0 0.0
      %389 = vmatprep.subr.mxu0 0.0
      %390 = vmatpush1.msra.mxu0 0.0
      %391 = vmatprep.subr.mxu0 0.0
      %392 = vmatpush1.msra.mxu0 0.0
      %393 = vmatprep.subr.mxu0 0.0
      %394 = vmatpush1.msra.mxu0 0.0
      %395 = vmatprep.subr.mxu0 0.0
      %396 = vmatpush1.msra.mxu0 0.0
      %397 = vmatprep.mubr.f32.mxu0 0.0
      %398 = vmatmul.mubr.f32.gmra.mrb[0].mxu0 %v238
      %v399 = vpop.f32.mrb[0].mxu0
      %v400 = vadd.f32 0.0, %v399
      %v401 = vpop.f32.mrb[0].mxu0
      %402 = vmatprep.mubr.f32.mxu0 0.0
      %403 = vmatmul.mubr.f32.gmra.mrb[0].mxu0 %v241
      %v404 = vpop.f32.mrb[0].mxu0
      %v405 = vadd.f32 0.0, %v404
      %v406 = vpop.f32.mrb[0].mxu0
      %407 = vmatprep.mubr.f32.mxu0 0.0
      %408 = vmatmul.mubr.f32.gmra.mrb[0].mxu0 %v244
      %v409 = vpop.f32.mrb[0].mxu0
      %v410 = vadd.f32 0.0, %v409
      %v411 = vpop.f32.mrb[0].mxu0
      %412 = vmatprep.mubr.f32.mxu0 0.0
      %413 = vmatmul.mubr.f32.gmra.mrb[0].mxu0 %v247
      %v414 = vpop.f32.mrb[0].mxu0
      %v415 = vadd.f32 0.0, %v414
      %v416 = vpop.f32.mrb[0].mxu0
      %417 = vmatprep.mubr.f32.mxu0 0.0
      %418 = vmatmul.mubr.f32.gmra.mrb[0].mxu0 %v250
      %v419 = vpop.f32.mrb[0].mxu0
      %v420 = vadd.f32 0.0, %v419
      %v421 = vpop.f32.mrb[0].mxu0
      %422 = vmatprep.mubr.f32.mxu0 0.0
      %423 = vmatmul.mubr.f32.gmra.mrb[0].mxu0 %v253
      %v424 = vpop.f32.mrb[0].mxu0
      %v425 = vadd.f32 0.0, %v424
      %v426 = vpop.f32.mrb[0].mxu0
      %427 = vmatprep.mubr.f32.mxu0 0.0
      %428 = vmatmul.mubr.f32.gmra.mrb[0].mxu0 %v256
      %v429 = vpop.f32.mrb[0].mxu0
      %v430 = vadd.f32 0.0, %v429
      %v431 = vpop.f32.mrb[0].mxu0
      %432 = vmatprep.mubr.f32.mxu0 0.0
      %433 = vmatmul.mubr.f32.gmra.mrb[0].mxu0 %v259
      %v434 = vpop.f32.mrb[0].mxu0
      %v435 = vadd.f32 0.0, %v434
      %v436 = vpop.f32.mrb[0].mxu0
      %437 = vmatprep.mubr.f32.mxu0 0.0
      %438 = vmatmul.mubr.f32.gmra.mrb[0].mxu0 %v262
      %v439 = vpop.f32.mrb[0].mxu0
      %v440 = vadd.f32 0.0, %v439
      %v441 = vpop.f32.mrb[0].mxu0
      %442 = vmatprep.mubr.f32.mxu0 0.0
      %443 = vmatmul.mubr.f32.gmra.mrb[0].mxu0 %v265
      %v444 = vpop.f32.mrb[0].mxu0
      %v445 = vadd.f32 0.0, %v444
      %v446 = vpop.f32.mrb[0].mxu0
      %447 = vmatprep.mubr.f32.mxu0 0.0
      %448 = vmatmul.mubr.f32.gmra.mrb[0].mxu0 %v268
      %v449 = vpop.f32.mrb[0].mxu0
      %v450 = vadd.f32 0.0, %v449
      %v451 = vpop.f32.mrb[0].mxu0
      %452 = vmatprep.mubr.f32.mxu0 0.0
      %453 = vmatmul.mubr.f32.gmra.mrb[0].mxu0 %v271
      %v454 = vpop.f32.mrb[0].mxu0
      %v455 = vadd.f32 0.0, %v454
      %v456 = vpop.f32.mrb[0].mxu0
      %457 = vmatprep.mubr.f32.mxu0 0.0
      %458 = vmatmul.mubr.f32.gmra.mrb[0].mxu0 %v274
      %v459 = vpop.f32.mrb[0].mxu0
      %v460 = vadd.f32 0.0, %v459
      %v461 = vpop.f32.mrb[0].mxu0
      %462 = vmatprep.mubr.f32.mxu0 0.0
      %463 = vmatmul.mubr.f32.gmra.mrb[0].mxu0 %v277
      %v464 = vpop.f32.mrb[0].mxu0
      %v465 = vadd.f32 0.0, %v464
      %v466 = vpop.f32.mrb[0].mxu0
      %467 = vmatprep.mubr.f32.mxu0 0.0
      %468 = vmatmul.mubr.f32.gmra.mrb[0].mxu0 %v280
      %v469 = vpop.f32.mrb[0].mxu0
      %v470 = vadd.f32 0.0, %v469
      %v471 = vpop.f32.mrb[0].mxu0
      %472 = vmatprep.mubr.f32.mxu0 0.0
      %473 = vmatmul.mubr.f32.gmra.mrb[0].mxu0 %v283
      %v474 = vpop.f32.mrb[0].mxu0
      %v475 = vadd.f32 0.0, %v474
      %v476 = vpop.f32.mrb[0].mxu0
      %477 = vmatprep.mubr.f32.mxu0 0.0
      %478 = vmatmul.mubr.f32.gmra.mrb[0].mxu0 %v286
      %v479 = vpop.f32.mrb[0].mxu0
      %v480 = vadd.f32 0.0, %v479
      %v481 = vpop.f32.mrb[0].mxu0
      %482 = vmatprep.mubr.f32.mxu0 0.0
      %483 = vmatmul.mubr.f32.gmra.mrb[0].mxu0 %v289
      %v484 = vpop.f32.mrb[0].mxu0
      %v485 = vadd.f32 0.0, %v484
      %v486 = vpop.f32.mrb[0].mxu0
      %487 = vmatprep.mubr.f32.mxu0 0.0
      %488 = vmatmul.mubr.f32.gmra.mrb[0].mxu0 %v292
      %v489 = vpop.f32.mrb[0].mxu0
      %v490 = vadd.f32 0.0, %v489
      %v491 = vpop.f32.mrb[0].mxu0
      %492 = vmatprep.mubr.f32.mxu0 0.0
      %493 = vmatmul.mubr.f32.gmra.mrb[0].mxu0 %v295
      %v494 = vpop.f32.mrb[0].mxu0
      %v495 = vadd.f32 0.0, %v494
      %v496 = vpop.f32.mrb[0].mxu0
      %497 = vmatprep.mubr.f32.mxu0 0.0
      %498 = vmatmul.mubr.f32.gmra.mrb[0].mxu0 %v298
      %v499 = vpop.f32.mrb[0].mxu0
      %v500 = vadd.f32 0.0, %v499
      %v501 = vpop.f32.mrb[0].mxu0
      %502 = vmatprep.mubr.f32.mxu0 0.0
      %503 = vmatmul.mubr.f32.gmra.mrb[0].mxu0 %v301
      %v504 = vpop.f32.mrb[0].mxu0
      %v505 = vadd.f32 0.0, %v504
      %v506 = vpop.f32.mrb[0].mxu0
      %507 = vmatprep.mubr.f32.mxu0 0.0
      %508 = vmatmul.mubr.f32.gmra.mrb[0].mxu0 %v304
      %v509 = vpop.f32.mrb[0].mxu0
      %v510 = vadd.f32 0.0, %v509
      %v511 = vpop.f32.mrb[0].mxu0
      %512 = vmatprep.mubr.f32.mxu0 0.0
      %513 = vmatmul.mubr.f32.gmra.mrb[0].mxu0 %v307
      %v514 = vpop.f32.mrb[0].mxu0
      %v515 = vadd.f32 0.0, %v514
      %v516 = vpop.f32.mrb[0].mxu0
      %517 = vmatprep.mubr.f32.mxu0 0.0
      %518 = vmatmul.mubr.f32.gmra.mrb[0].mxu0 %v310
      %v519 = vpop.f32.mrb[0].mxu0
      %v520 = vadd.f32 0.0, %v519
      %v521 = vpop.f32.mrb[0].mxu0
      %522 = vmatprep.mubr.f32.mxu0 0.0
      %523 = vmatmul.mubr.f32.gmra.mrb[0].mxu0 %v313
      %v524 = vpop.f32.mrb[0].mxu0
      %v525 = vadd.f32 0.0, %v524
      %v526 = vpop.f32.mrb[0].mxu0
      %527 = vmatprep.mubr.f32.mxu0 0.0
      %528 = vmatmul.mubr.f32.gmra.mrb[0].mxu0 %v316
      %v529 = vpop.f32.mrb[0].mxu0
      %v530 = vadd.f32 0.0, %v529
      %v531 = vpop.f32.mrb[0].mxu0
      %532 = vmatprep.mubr.f32.mxu0 0.0
      %533 = vmatmul.mubr.f32.gmra.mrb[0].mxu0 %v319
      %v534 = vpop.f32.mrb[0].mxu0
      %v535 = vadd.f32 0.0, %v534
      %v536 = vpop.f32.mrb[0].mxu0
      %537 = vmatprep.mubr.f32.mxu0 0.0
      %538 = vmatmul.mubr.f32.gmra.mrb[0].mxu0 %v322
      %v539 = vpop.f32.mrb[0].mxu0
      %v540 = vadd.f32 0.0, %v539
      %v541 = vpop.f32.mrb[0].mxu0
      %542 = vmatprep.mubr.f32.mxu0 0.0
      %543 = vmatmul.mubr.f32.gmra.mrb[0].mxu0 %v325
      %v544 = vpop.f32.mrb[0].mxu0
      %v545 = vadd.f32 0.0, %v544
      %v546 = vpop.f32.mrb[0].mxu0
      %547 = vmatprep.mubr.f32.mxu0 0.0
      %548 = vmatmul.mubr.f32.gmra.mrb[0].mxu0 %v328
      %v549 = vpop.f32.mrb[0].mxu0
      %v550 = vadd.f32 0.0, %v549
      %v551 = vpop.f32.mrb[0].mxu0
      %552 = vmatprep.mubr.f32.mxu0 0.0
      %553 = vmatmul.mubr.f32.gmra.mrb[0].mxu0 %v331
      %v554 = vpop.f32.mrb[0].mxu0
      %v555 = vadd.f32 0.0, %v554
      %v556 = vpop.f32.mrb[0].mxu0
      %557 = vdwg.mxu0
      %v559 = vlaneseq
      %v560 = vshrl.u32 %v559, 7
      %v561 = vsub.s32 0, %v560
      %v562 = vrot.slane %v234, %v561
      %v564 = vmul.f32 %v400, %v562
      %v565 = vmul.f32 %v405, %v562
      %v566 = vmul.f32 %v410, %v562
      %v567 = vmul.f32 %v415, %v562
      %v568 = vmul.f32 %v420, %v562
      %v569 = vmul.f32 %v425, %v562
      %v570 = vmul.f32 %v430, %v562
      %v571 = vmul.f32 %v435, %v562
      %v572 = vmul.f32 %v440, %v562
      %v573 = vmul.f32 %v445, %v562
      %v574 = vmul.f32 %v450, %v562
      %v575 = vmul.f32 %v455, %v562
      %v576 = vmul.f32 %v460, %v562
      %v577 = vmul.f32 %v465, %v562
      %v578 = vmul.f32 %v470, %v562
      %v579 = vmul.f32 %v475, %v562
      %v580 = vmul.f32 %v480, %v562
      %v581 = vmul.f32 %v485, %v562
      %v582 = vmul.f32 %v490, %v562
      %v583 = vmul.f32 %v495, %v562
      %v584 = vmul.f32 %v500, %v562
      %v585 = vmul.f32 %v505, %v562
      %v586 = vmul.f32 %v510, %v562
      %v587 = vmul.f32 %v515, %v562
      %v588 = vmul.f32 %v520, %v562
      %v589 = vmul.f32 %v525, %v562
      %v590 = vmul.f32 %v530, %v562
      %v591 = vmul.f32 %v535, %v562
      %v592 = vmul.f32 %v540, %v562
      %v593 = vmul.f32 %v545, %v562
      %v594 = vmul.f32 %v550, %v562
      %v595 = vmul.f32 %v555, %v562
      %v597 = vlaneseq
      %v598 = vshrl.u32 %v597, 7
      %v599 = vsub.s32 0, %v598
      %v600 = vrot.slane %v235, %v599
      %v602 = vadd.f32 %v564, %v600
      %v603 = vadd.f32 %v565, %v600
      %v604 = vadd.f32 %v566, %v600
      %v605 = vadd.f32 %v567, %v600
      %v606 = vadd.f32 %v568, %v600
      %v607 = vadd.f32 %v569, %v600
      %v608 = vadd.f32 %v570, %v600
      %v609 = vadd.f32 %v571, %v600
      %v610 = vadd.f32 %v572, %v600
      %v611 = vadd.f32 %v573, %v600
      %v612 = vadd.f32 %v574, %v600
      %v613 = vadd.f32 %v575, %v600
      %v614 = vadd.f32 %v576, %v600
      %v615 = vadd.f32 %v577, %v600
      %v616 = vadd.f32 %v578, %v600
      %v617 = vadd.f32 %v579, %v600
      %v618 = vadd.f32 %v580, %v600
      %v619 = vadd.f32 %v581, %v600
      %v620 = vadd.f32 %v582, %v600
      %v621 = vadd.f32 %v583, %v600
      %v622 = vadd.f32 %v584, %v600
      %v623 = vadd.f32 %v585, %v600
      %v624 = vadd.f32 %v586, %v600
      %v625 = vadd.f32 %v587, %v600
      %v626 = vadd.f32 %v588, %v600
      %v627 = vadd.f32 %v589, %v600
      %v628 = vadd.f32 %v590, %v600
      %v629 = vadd.f32 %v591, %v600
      %v630 = vadd.f32 %v592, %v600
      %v631 = vadd.f32 %v593, %v600
      %v632 = vadd.f32 %v594, %v600
      %v633 = vadd.f32 %v595, %v600
      %v634 = vmax.f32 %v602, %v610
      %v635 = vmax.f32 %v603, %v611
      %v636 = vmax.f32 %v604, %v612
      %v637 = vmax.f32 %v605, %v613
      %v638 = vmax.f32 %v606, %v614
      %v639 = vmax.f32 %v607, %v615
      %v640 = vmax.f32 %v608, %v616
      %v641 = vmax.f32 %v609, %v617
      %v642 = vmax.f32 %v618, %v626
      %v643 = vmax.f32 %v619, %v627
      %v644 = vmax.f32 %v620, %v628
      %v645 = vmax.f32 %v621, %v629
      %v646 = vmax.f32 %v622, %v630
      %v647 = vmax.f32 %v623, %v631
      %v648 = vmax.f32 %v624, %v632
      %v649 = vmax.f32 %v625, %v633
      %v650 = vmax.f32 %v634, %v642
      %v651 = vmax.f32 %v635, %v643
      %v652 = vmax.f32 %v636, %v644
      %v653 = vmax.f32 %v637, %v645
      %v654 = vmax.f32 %v638, %v646
      %v655 = vmax.f32 %v639, %v647
      %v656 = vmax.f32 %v640, %v648
      %v657 = vmax.f32 %v641, %v649
      %v658 = vmax.f32 %v650, 0.0
      %v659 = vmax.f32 %v651, 0.0
      %v660 = vmax.f32 %v652, 0.0
      %v661 = vmax.f32 %v653, 0.0
      %v662 = vmax.f32 %v654, 0.0
      %v663 = vmax.f32 %v655, 0.0
      %v664 = vmax.f32 %v656, 0.0
      %v665 = vmax.f32 %v657, 0.0
      %666 = vst.msk [vmem:[%s197] sm:$0xff] %vm236, %v658
      %667 = vst.msk [vmem:[%s197 + $0x8] sm:$0xff] %vm236, %v659
      %668 = vst.msk [vmem:[%s197 + $0x10] sm:$0xff] %vm236, %v660
      %669 = vst.msk [vmem:[%s197 + $0x18] sm:$0xff] %vm236, %v661
      %670 = vst.msk [vmem:[%s197 + $0x20] sm:$0xff] %vm236, %v662
      %671 = vst.msk [vmem:[%s197 + $0x28] sm:$0xff] %vm236, %v663
      %672 = vst.msk [vmem:[%s197 + $0x30] sm:$0xff] %vm236, %v664
      %673 = vst.msk [vmem:[%s197 + $0x38] sm:$0xff] %vm236, %v665
      %p674 = scmp.lt.s32.totalorder %s15, 1
      %s675 = scalar_select %p674, %s15, 1
      %s676 = smul.addr %s675, 8
      %s677 = smul.addr %s676, 8
      %s678 = scalar_lea.vmem %s4, %s677
      // Predicated region
      $region37: #{_lambda_.2} parent=35 // pred_check
        %p679 = pneg %p122
      $region38: #{_lambda_.2} parent=35 // pred_check_branch
        %681 = sbr.rel (%p679) target = $region40
      $region39: #{_lambda_.2} parent=35 // pred_region
        _
      $region40: #{_lambda_.2} parent=35 // pred_fallthru
        _
    $region36: #{_lambda_.2} parent=5 // pred_fallthru
      _
    %p682 = scmp.le.s32.totalorder 2, %s10
    // Predicated region
    $region41: #{_lambda_.2} parent=5 // pred_check
      %p683 = pneg %p682
    $region42: #{_lambda_.2} parent=5 // pred_check_branch
      %685 = sbr.rel (%p683) target = $region44
    $region43: #{_lambda_.2} parent=5 // pred_region
      %s686 = ssub.s32 %s10, 2
      // Predicated region
      $region45: #{_lambda_.2} parent=43 // pred_check
        %p687 = pneg %p128
      $region46: #{_lambda_.2} parent=43 // pred_check_branch
        %689 = sbr.rel (%p687) target = $region48
      $region47: #{_lambda_.2} parent=43 // pred_region
        %p690 = scmp.lt.s32.totalorder %s16, 1
        %s691 = scalar_select %p690, %s16, 1
        %s692 = smul.addr %s691, 8
        %s693 = smul.addr %s692, 8
        %s694 = scalar_lea.vmem %s4, %s693
      $region48: #{_lambda_.2} parent=43 // pred_fallthru
        _
    $region44: #{_lambda_.2} parent=5 // pred_fallthru
      _
  $region6: #{_lambda_.2} parent=0 // loop_footer
    %s14 = sadd.s32 1, %s10
  $region7: #{_lambda_.2} parent=0 // loop_footer_branch
    %9 = sbr.rel target = $region3
  $region8: #{_lambda_.2} parent=0 // loop_exit
    _

// kernel: _lambda_.3
$region0: #{_lambda_.3}
  #allocation0 [shape = 'u32[]', space=smem, size = 0x4, offset = 0x4, fixed_abs, tag = 'smem constant byte address 0x4 - core index']
  #allocation1 [shape = 'u32[144,128]{1,0:T(1,128)}', space=vmem, size = 0x12000, scoped, tag = 'internal scratch']
  %s0 = inlined_call_operand.vmem [shape: f32[2,2048], index: 0, kind: input, shape index: {}]
  %s1 = inlined_call_operand.vmem [shape: f32[2048,128], index: 1, kind: input, shape index: {}]
  %s2 = inlined_call_operand.vmem [shape: f32[1,128], index: 2, kind: input, shape index: {}]
  %s3 = inlined_call_operand.vmem [shape: f32[128,10], index: 3, kind: input, shape index: {}]
  %s4 = inlined_call_operand.vmem [shape: f32[1,10], index: 4, kind: input, shape index: {}]
  %s5 = inlined_call_operand.hbm [shape: f32[2,10], index: 5, kind: output, shape index: {}]
  %s6 = sld [smem:[#allocation0]]
  $region30: #{_lambda_.3} parent=0
    _
  %s8 = ssub.s32 1, %s6
  %s9 = scalar_select 0, %s8, %s6
  $region1: #{_lambda_.3} parent=0
    #allocation2 [shape = 'u8[1024]{0}', space=vmem, size = 0x400, scoped, tag = 'output window, operand 0, single buffered']
    #allocation3 [shape = 's32[1]{0}', space=sflag, size = 0x4, scoped, tag = 'scoped memory for _lambda_.3']
    %10 = vsyncpa [#allocation3], 0
    // Predicated region
    $region2: #{_lambda_.3} parent=1 // pred_check
      _
    $region3: #{_lambda_.3} parent=1 // pred_check_branch
      %12 = sbr.rel (0) target = $region5
    $region4: #{_lambda_.3} parent=1 // pred_region
      _
    $region5: #{_lambda_.3} parent=1 // pred_fallthru
      _
    // Predicated region
    $region6: #{_lambda_.3} parent=1 // pred_check
      _
    $region7: #{_lambda_.3} parent=1 // pred_check_branch
      %14 = sbr.rel (0) target = $region9
    $region8: #{_lambda_.3} parent=1 // pred_region
      _
    $region9: #{_lambda_.3} parent=1 // pred_fallthru
      _
    // Predicated region
    $region10: #{_lambda_.3} parent=1 // pred_check
      _
    $region11: #{_lambda_.3} parent=1 // pred_check_branch
      %16 = sbr.rel (0) target = $region13
    $region12: #{_lambda_.3} parent=1 // pred_region
      _
    $region13: #{_lambda_.3} parent=1 // pred_fallthru
      _
    // Predicated region
    $region14: #{_lambda_.3} parent=1 // pred_check
      _
    $region15: #{_lambda_.3} parent=1 // pred_check_branch
      %18 = sbr.rel (0) target = $region17
    $region16: #{_lambda_.3} parent=1 // pred_region
      _
    $region17: #{_lambda_.3} parent=1 // pred_fallthru
      _
    // Predicated region
    $region18: #{_lambda_.3} parent=1 // pred_check
      _
    $region19: #{_lambda_.3} parent=1 // pred_check_branch
      %20 = sbr.rel (0) target = $region21
    $region20: #{_lambda_.3} parent=1 // pred_region
      _
    $region21: #{_lambda_.3} parent=1 // pred_fallthru
      _
    %v21 = vld [vmem:[%s0] sm:$0xff]
    %v22 = vld [vmem:[%s0 + $0x8] sm:$0xff]
    %v23 = vld [vmem:[%s0 + $0x10] sm:$0xff]
    %v24 = vld [vmem:[%s0 + $0x18] sm:$0xff]
    %v25 = vld [vmem:[%s1] sm:$0xff]
    %v26 = vld [vmem:[%s1 + $0x8] sm:$0xff]
    %v27 = vld [vmem:[%s1 + $0x10] sm:$0xff]
    %v28 = vld [vmem:[%s1 + $0x18] sm:$0xff]
    %v29 = vld [vmem:[%s1 + $0x20] sm:$0xff]
    %v30 = vld [vmem:[%s1 + $0x28] sm:$0xff]
    %v31 = vld [vmem:[%s1 + $0x30] sm:$0xff]
    %v32 = vld [vmem:[%s1 + $0x38] sm:$0xff]
    %v33 = vld [vmem:[%s1 + $0x40] sm:$0xff]
    %v34 = vld [vmem:[%s1 + $0x48] sm:$0xff]
    %v35 = vld [vmem:[%s1 + $0x50] sm:$0xff]
    %v36 = vld [vmem:[%s1 + $0x58] sm:$0xff]
    %v37 = vld [vmem:[%s1 + $0x60] sm:$0xff]
    %v38 = vld [vmem:[%s1 + $0x68] sm:$0xff]
    %v39 = vld [vmem:[%s1 + $0x70] sm:$0xff]
    %v40 = vld [vmem:[%s1 + $0x78] sm:$0xff]
    %v41 = vld [vmem:[%s1 + $0x80] sm:$0xff]
    %v42 = vld [vmem:[%s1 + $0x88] sm:$0xff]
    %v43 = vld [vmem:[%s1 + $0x90] sm:$0xff]
    %v44 = vld [vmem:[%s1 + $0x98] sm:$0xff]
    %v45 = vld [vmem:[%s1 + $0xa0] sm:$0xff]
    %v46 = vld [vmem:[%s1 + $0xa8] sm:$0xff]
    %v47 = vld [vmem:[%s1 + $0xb0] sm:$0xff]
    %v48 = vld [vmem:[%s1 + $0xb8] sm:$0xff]
    %v49 = vld [vmem:[%s1 + $0xc0] sm:$0xff]
    %v50 = vld [vmem:[%s1 + $0xc8] sm:$0xff]
    %v51 = vld [vmem:[%s1 + $0xd0] sm:$0xff]
    %v52 = vld [vmem:[%s1 + $0xd8] sm:$0xff]
    %v53 = vld [vmem:[%s1 + $0xe0] sm:$0xff]
    %v54 = vld [vmem:[%s1 + $0xe8] sm:$0xff]
    %v55 = vld [vmem:[%s1 + $0xf0] sm:$0xff]
    %v56 = vld [vmem:[%s1 + $0xf8] sm:$0xff]
    %v57 = vld [vmem:[%s1 + $0x100] sm:$0xff]
    %v58 = vld [vmem:[%s1 + $0x108] sm:$0xff]
    %v59 = vld [vmem:[%s1 + $0x110] sm:$0xff]
    %v60 = vld [vmem:[%s1 + $0x118] sm:$0xff]
    %v61 = vld [vmem:[%s1 + $0x120] sm:$0xff]
    %v62 = vld [vmem:[%s1 + $0x128] sm:$0xff]
    %v63 = vld [vmem:[%s1 + $0x130] sm:$0xff]
    %v64 = vld [vmem:[%s1 + $0x138] sm:$0xff]
    %v65 = vld [vmem:[%s1 + $0x140] sm:$0xff]
    %v66 = vld [vmem:[%s1 + $0x148] sm:$0xff]
    %v67 = vld [vmem:[%s1 + $0x150] sm:$0xff]
    %v68 = vld [vmem:[%s1 + $0x158] sm:$0xff]
    %v69 = vld [vmem:[%s1 + $0x160] sm:$0xff]
    %v70 = vld [vmem:[%s1 + $0x168] sm:$0xff]
    %v71 = vld [vmem:[%s1 + $0x170] sm:$0xff]
    %v72 = vld [vmem:[%s1 + $0x178] sm:$0xff]
    %v73 = vld [vmem:[%s1 + $0x180] sm:$0xff]
    %v74 = vld [vmem:[%s1 + $0x188] sm:$0xff]
    %v75 = vld [vmem:[%s1 + $0x190] sm:$0xff]
    %v76 = vld [vmem:[%s1 + $0x198] sm:$0xff]
    %v77 = vld [vmem:[%s1 + $0x1a0] sm:$0xff]
    %v78 = vld [vmem:[%s1 + $0x1a8] sm:$0xff]
    %v79 = vld [vmem:[%s1 + $0x1b0] sm:$0xff]
    %v80 = vld [vmem:[%s1 + $0x1b8] sm:$0xff]
    %v81 = vld [vmem:[%s1 + $0x1c0] sm:$0xff]
    %v82 = vld [vmem:[%s1 + $0x1c8] sm:$0xff]
    %v83 = vld [vmem:[%s1 + $0x1d0] sm:$0xff]
    %v84 = vld [vmem:[%s1 + $0x1d8] sm:$0xff]
    %v85 = vld [vmem:[%s1 + $0x1e0] sm:$0xff]
    %v86 = vld [vmem:[%s1 + $0x1e8] sm:$0xff]
    %v87 = vld [vmem:[%s1 + $0x1f0] sm:$0xff]
    %v88 = vld [vmem:[%s1 + $0x1f8] sm:$0xff]
    %v89 = vld [vmem:[%s1 + $0x200] sm:$0xff]
    %v90 = vld [vmem:[%s1 + $0x208] sm:$0xff]
    %v91 = vld [vmem:[%s1 + $0x210] sm:$0xff]
    %v92 = vld [vmem:[%s1 + $0x218] sm:$0xff]
    %v93 = vld [vmem:[%s1 + $0x220] sm:$0xff]
    %v94 = vld [vmem:[%s1 + $0x228] sm:$0xff]
    %v95 = vld [vmem:[%s1 + $0x230] sm:$0xff]
    %v96 = vld [vmem:[%s1 + $0x238] sm:$0xff]
    %v97 = vld [vmem:[%s1 + $0x240] sm:$0xff]
    %v98 = vld [vmem:[%s1 + $0x248] sm:$0xff]
    %v99 = vld [vmem:[%s1 + $0x250] sm:$0xff]
    %v100 = vld [vmem:[%s1 + $0x258] sm:$0xff]
    %v101 = vld [vmem:[%s1 + $0x260] sm:$0xff]
    %v102 = vld [vmem:[%s1 + $0x268] sm:$0xff]
    %v103 = vld [vmem:[%s1 + $0x270] sm:$0xff]
    %v104 = vld [vmem:[%s1 + $0x278] sm:$0xff]
    %v105 = vld [vmem:[%s1 + $0x280] sm:$0xff]
    %v106 = vld [vmem:[%s1 + $0x288] sm:$0xff]
    %v107 = vld [vmem:[%s1 + $0x290] sm:$0xff]
    %v108 = vld [vmem:[%s1 + $0x298] sm:$0xff]
    %v109 = vld [vmem:[%s1 + $0x2a0] sm:$0xff]
    %v110 = vld [vmem:[%s1 + $0x2a8] sm:$0xff]
    %v111 = vld [vmem:[%s1 + $0x2b0] sm:$0xff]
    %v112 = vld [vmem:[%s1 + $0x2b8] sm:$0xff]
    %v113 = vld [vmem:[%s1 + $0x2c0] sm:$0xff]
    %v114 = vld [vmem:[%s1 + $0x2c8] sm:$0xff]
    %v115 = vld [vmem:[%s1 + $0x2d0] sm:$0xff]
    %v116 = vld [vmem:[%s1 + $0x2d8] sm:$0xff]
    %v117 = vld [vmem:[%s1 + $0x2e0] sm:$0xff]
    %v118 = vld [vmem:[%s1 + $0x2e8] sm:$0xff]
    %v119 = vld [vmem:[%s1 + $0x2f0] sm:$0xff]
    %v120 = vld [vmem:[%s1 + $0x2f8] sm:$0xff]
    %v121 = vld [vmem:[%s1 + $0x300] sm:$0xff]
    %v122 = vld [vmem:[%s1 + $0x308] sm:$0xff]
    %v123 = vld [vmem:[%s1 + $0x310] sm:$0xff]
    %v124 = vld [vmem:[%s1 + $0x318] sm:$0xff]
    %v125 = vld [vmem:[%s1 + $0x320] sm:$0xff]
    %v126 = vld [vmem:[%s1 + $0x328] sm:$0xff]
    %v127 = vld [vmem:[%s1 + $0x330] sm:$0xff]
    %v128 = vld [vmem:[%s1 + $0x338] sm:$0xff]
    %v129 = vld [vmem:[%s1 + $0x340] sm:$0xff]
    %v130 = vld [vmem:[%s1 + $0x348] sm:$0xff]
    %v131 = vld [vmem:[%s1 + $0x350] sm:$0xff]
    %v132 = vld [vmem:[%s1 + $0x358] sm:$0xff]
    %v133 = vld [vmem:[%s1 + $0x360] sm:$0xff]
    %v134 = vld [vmem:[%s1 + $0x368] sm:$0xff]
    %v135 = vld [vmem:[%s1 + $0x370] sm:$0xff]
    %v136 = vld [vmem:[%s1 + $0x378] sm:$0xff]
    %v137 = vld [vmem:[%s1 + $0x380] sm:$0xff]
    %v138 = vld [vmem:[%s1 + $0x388] sm:$0xff]
    %v139 = vld [vmem:[%s1 + $0x390] sm:$0xff]
    %v140 = vld [vmem:[%s1 + $0x398] sm:$0xff]
    %v141 = vld [vmem:[%s1 + $0x3a0] sm:$0xff]
    %v142 = vld [vmem:[%s1 + $0x3a8] sm:$0xff]
    %v143 = vld [vmem:[%s1 + $0x3b0] sm:$0xff]
    %v144 = vld [vmem:[%s1 + $0x3b8] sm:$0xff]
    %v145 = vld [vmem:[%s1 + $0x3c0] sm:$0xff]
    %v146 = vld [vmem:[%s1 + $0x3c8] sm:$0xff]
    %v147 = vld [vmem:[%s1 + $0x3d0] sm:$0xff]
    %v148 = vld [vmem:[%s1 + $0x3d8] sm:$0xff]
    %v149 = vld [vmem:[%s1 + $0x3e0] sm:$0xff]
    %v150 = vld [vmem:[%s1 + $0x3e8] sm:$0xff]
    %v151 = vld [vmem:[%s1 + $0x3f0] sm:$0xff]
    %v152 = vld [vmem:[%s1 + $0x3f8] sm:$0xff]
    %v153 = vld [vmem:[%s1 + $0x400] sm:$0xff]
    %v154 = vld [vmem:[%s1 + $0x408] sm:$0xff]
    %v155 = vld [vmem:[%s1 + $0x410] sm:$0xff]
    %v156 = vld [vmem:[%s1 + $0x418] sm:$0xff]
    %v157 = vld [vmem:[%s1 + $0x420] sm:$0xff]
    %v158 = vld [vmem:[%s1 + $0x428] sm:$0xff]
    %v159 = vld [vmem:[%s1 + $0x430] sm:$0xff]
    %v160 = vld [vmem:[%s1 + $0x438] sm:$0xff]
    %v161 = vld [vmem:[%s1 + $0x440] sm:$0xff]
    %v162 = vld [vmem:[%s1 + $0x448] sm:$0xff]
    %v163 = vld [vmem:[%s1 + $0x450] sm:$0xff]
    %v164 = vld [vmem:[%s1 + $0x458] sm:$0xff]
    %v165 = vld [vmem:[%s1 + $0x460] sm:$0xff]
    %v166 = vld [vmem:[%s1 + $0x468] sm:$0xff]
    %v167 = vld [vmem:[%s1 + $0x470] sm:$0xff]
    %v168 = vld [vmem:[%s1 + $0x478] sm:$0xff]
    %v169 = vld [vmem:[%s1 + $0x480] sm:$0xff]
    %v170 = vld [vmem:[%s1 + $0x488] sm:$0xff]
    %v171 = vld [vmem:[%s1 + $0x490] sm:$0xff]
    %v172 = vld [vmem:[%s1 + $0x498] sm:$0xff]
    %v173 = vld [vmem:[%s1 + $0x4a0] sm:$0xff]
    %v174 = vld [vmem:[%s1 + $0x4a8] sm:$0xff]
    %v175 = vld [vmem:[%s1 + $0x4b0] sm:$0xff]
    %v176 = vld [vmem:[%s1 + $0x4b8] sm:$0xff]
    %v177 = vld [vmem:[%s1 + $0x4c0] sm:$0xff]
    %v178 = vld [vmem:[%s1 + $0x4c8] sm:$0xff]
    %v179 = vld [vmem:[%s1 + $0x4d0] sm:$0xff]
    %v180 = vld [vmem:[%s1 + $0x4d8] sm:$0xff]
    %v181 = vld [vmem:[%s1 + $0x4e0] sm:$0xff]
    %v182 = vld [vmem:[%s1 + $0x4e8] sm:$0xff]
    %v183 = vld [vmem:[%s1 + $0x4f0] sm:$0xff]
    %v184 = vld [vmem:[%s1 + $0x4f8] sm:$0xff]
    %v185 = vld [vmem:[%s1 + $0x500] sm:$0xff]
    %v186 = vld [vmem:[%s1 + $0x508] sm:$0xff]
    %v187 = vld [vmem:[%s1 + $0x510] sm:$0xff]
    %v188 = vld [vmem:[%s1 + $0x518] sm:$0xff]
    %v189 = vld [vmem:[%s1 + $0x520] sm:$0xff]
    %v190 = vld [vmem:[%s1 + $0x528] sm:$0xff]
    %v191 = vld [vmem:[%s1 + $0x530] sm:$0xff]
    %v192 = vld [vmem:[%s1 + $0x538] sm:$0xff]
    %v193 = vld [vmem:[%s1 + $0x540] sm:$0xff]
    %v194 = vld [vmem:[%s1 + $0x548] sm:$0xff]
    %v195 = vld [vmem:[%s1 + $0x550] sm:$0xff]
    %v196 = vld [vmem:[%s1 + $0x558] sm:$0xff]
    %v197 = vld [vmem:[%s1 + $0x560] sm:$0xff]
    %v198 = vld [vmem:[%s1 + $0x568] sm:$0xff]
    %v199 = vld [vmem:[%s1 + $0x570] sm:$0xff]
    %v200 = vld [vmem:[%s1 + $0x578] sm:$0xff]
    %v201 = vld [vmem:[%s1 + $0x580] sm:$0xff]
    %v202 = vld [vmem:[%s1 + $0x588] sm:$0xff]
    %v203 = vld [vmem:[%s1 + $0x590] sm:$0xff]
    %v204 = vld [vmem:[%s1 + $0x598] sm:$0xff]
    %v205 = vld [vmem:[%s1 + $0x5a0] sm:$0xff]
    %v206 = vld [vmem:[%s1 + $0x5a8] sm:$0xff]
    %v207 = vld [vmem:[%s1 + $0x5b0] sm:$0xff]
    %v208 = vld [vmem:[%s1 + $0x5b8] sm:$0xff]
    %v209 = vld [vmem:[%s1 + $0x5c0] sm:$0xff]
    %v210 = vld [vmem:[%s1 + $0x5c8] sm:$0xff]
    %v211 = vld [vmem:[%s1 + $0x5d0] sm:$0xff]
    %v212 = vld [vmem:[%s1 + $0x5d8] sm:$0xff]
    %v213 = vld [vmem:[%s1 + $0x5e0] sm:$0xff]
    %v214 = vld [vmem:[%s1 + $0x5e8] sm:$0xff]
    %v215 = vld [vmem:[%s1 + $0x5f0] sm:$0xff]
    %v216 = vld [vmem:[%s1 + $0x5f8] sm:$0xff]
    %v217 = vld [vmem:[%s1 + $0x600] sm:$0xff]
    %v218 = vld [vmem:[%s1 + $0x608] sm:$0xff]
    %v219 = vld [vmem:[%s1 + $0x610] sm:$0xff]
    %v220 = vld [vmem:[%s1 + $0x618] sm:$0xff]
    %v221 = vld [vmem:[%s1 + $0x620] sm:$0xff]
    %v222 = vld [vmem:[%s1 + $0x628] sm:$0xff]
    %v223 = vld [vmem:[%s1 + $0x630] sm:$0xff]
    %v224 = vld [vmem:[%s1 + $0x638] sm:$0xff]
    %v225 = vld [vmem:[%s1 + $0x640] sm:$0xff]
    %v226 = vld [vmem:[%s1 + $0x648] sm:$0xff]
    %v227 = vld [vmem:[%s1 + $0x650] sm:$0xff]
    %v228 = vld [vmem:[%s1 + $0x658] sm:$0xff]
    %v229 = vld [vmem:[%s1 + $0x660] sm:$0xff]
    %v230 = vld [vmem:[%s1 + $0x668] sm:$0xff]
    %v231 = vld [vmem:[%s1 + $0x670] sm:$0xff]
    %v232 = vld [vmem:[%s1 + $0x678] sm:$0xff]
    %v233 = vld [vmem:[%s1 + $0x680] sm:$0xff]
    %v234 = vld [vmem:[%s1 + $0x688] sm:$0xff]
    %v235 = vld [vmem:[%s1 + $0x690] sm:$0xff]
    %v236 = vld [vmem:[%s1 + $0x698] sm:$0xff]
    %v237 = vld [vmem:[%s1 + $0x6a0] sm:$0xff]
    %v238 = vld [vmem:[%s1 + $0x6a8] sm:$0xff]
    %v239 = vld [vmem:[%s1 + $0x6b0] sm:$0xff]
    %v240 = vld [vmem:[%s1 + $0x6b8] sm:$0xff]
    %v241 = vld [vmem:[%s1 + $0x6c0] sm:$0xff]
    %v242 = vld [vmem:[%s1 + $0x6c8] sm:$0xff]
    %v243 = vld [vmem:[%s1 + $0x6d0] sm:$0xff]
    %v244 = vld [vmem:[%s1 + $0x6d8] sm:$0xff]
    %v245 = vld [vmem:[%s1 + $0x6e0] sm:$0xff]
    %v246 = vld [vmem:[%s1 + $0x6e8] sm:$0xff]
    %v247 = vld [vmem:[%s1 + $0x6f0] sm:$0xff]
    %v248 = vld [vmem:[%s1 + $0x6f8] sm:$0xff]
    %v249 = vld [vmem:[%s1 + $0x700] sm:$0xff]
    %v250 = vld [vmem:[%s1 + $0x708] sm:$0xff]
    %v251 = vld [vmem:[%s1 + $0x710] sm:$0xff]
    %v252 = vld [vmem:[%s1 + $0x718] sm:$0xff]
    %v253 = vld [vmem:[%s1 + $0x720] sm:$0xff]
    %v254 = vld [vmem:[%s1 + $0x728] sm:$0xff]
    %v255 = vld [vmem:[%s1 + $0x730] sm:$0xff]
    %v256 = vld [vmem:[%s1 + $0x738] sm:$0xff]
    %v257 = vld [vmem:[%s1 + $0x740] sm:$0xff]
    %v258 = vld [vmem:[%s1 + $0x748] sm:$0xff]
    %v259 = vld [vmem:[%s1 + $0x750] sm:$0xff]
    %v260 = vld [vmem:[%s1 + $0x758] sm:$0xff]
    %v261 = vld [vmem:[%s1 + $0x760] sm:$0xff]
    %v262 = vld [vmem:[%s1 + $0x768] sm:$0xff]
    %v263 = vld [vmem:[%s1 + $0x770] sm:$0xff]
    %v264 = vld [vmem:[%s1 + $0x778] sm:$0xff]
    %v265 = vld [vmem:[%s1 + $0x780] sm:$0xff]
    %v266 = vld [vmem:[%s1 + $0x788] sm:$0xff]
    %v267 = vld [vmem:[%s1 + $0x790] sm:$0xff]
    %v268 = vld [vmem:[%s1 + $0x798] sm:$0xff]
    %v269 = vld [vmem:[%s1 + $0x7a0] sm:$0xff]
    %v270 = vld [vmem:[%s1 + $0x7a8] sm:$0xff]
    %v271 = vld [vmem:[%s1 + $0x7b0] sm:$0xff]
    %v272 = vld [vmem:[%s1 + $0x7b8] sm:$0xff]
    %v273 = vld [vmem:[%s1 + $0x7c0] sm:$0xff]
    %v274 = vld [vmem:[%s1 + $0x7c8] sm:$0xff]
    %v275 = vld [vmem:[%s1 + $0x7d0] sm:$0xff]
    %v276 = vld [vmem:[%s1 + $0x7d8] sm:$0xff]
    %v277 = vld [vmem:[%s1 + $0x7e0] sm:$0xff]
    %v278 = vld [vmem:[%s1 + $0x7e8] sm:$0xff]
    %v279 = vld [vmem:[%s1 + $0x7f0] sm:$0xff]
    %v280 = vld [vmem:[%s1 + $0x7f8] sm:$0xff]
    %v281 = vld [vmem:[%s2] sm:$0x1]
    %v282 = vld [vmem:[%s3] sm:$0xff]
    %v283 = vld [vmem:[%s3 + $0x8] sm:$0xff]
    %v284 = vld [vmem:[%s3 + $0x10] sm:$0xff]
    %v285 = vld [vmem:[%s3 + $0x18] sm:$0xff]
    %v286 = vld [vmem:[%s3 + $0x20] sm:$0xff]
    %v287 = vld [vmem:[%s3 + $0x28] sm:$0xff]
    %v288 = vld [vmem:[%s3 + $0x30] sm:$0xff]
    %v289 = vld [vmem:[%s3 + $0x38] sm:$0xff]
    %v290 = vld [vmem:[%s3 + $0x40] sm:$0xff]
    %v291 = vld [vmem:[%s3 + $0x48] sm:$0xff]
    %v292 = vld [vmem:[%s3 + $0x50] sm:$0xff]
    %v293 = vld [vmem:[%s3 + $0x58] sm:$0xff]
    %v294 = vld [vmem:[%s3 + $0x60] sm:$0xff]
    %v295 = vld [vmem:[%s3 + $0x68] sm:$0xff]
    %v296 = vld [vmem:[%s3 + $0x70] sm:$0xff]
    %v297 = vld [vmem:[%s3 + $0x78] sm:$0xff]
    %v298 = vld [vmem:[%s4] sm:$0x1]
    %v300 = vlaneseq
    %v301 = vshrl.u32 %v300, 7
    %v302 = vsub.s32 0, %v301
    %v303 = vrot.slane %v281, %v302
    %v309 = vcombine.high %v21, %v21
    %v311 = vunpack.c.l.s4 1983009808
    %v312 = vunpack.c.0.s8 %v311
    %v313 = vlaneseq
    %v314 = vshrl.u32 %v313, 7
    %v315 = vsub.s32 %v312, %v314
    %v316 = vrot.slane %v21, %v315
    %v318 = vunpack.c.l.s4 1983009808
    %v319 = vunpack.c.0.s8 %v318
    %v320 = vlaneseq
    %v321 = vshrl.u32 %v320, 7
    %v322 = vsub.s32 %v319, %v321
    %v323 = vrot.slane %v309, %v322
    %v324 = vcombine.high %v316, %v316
    %v325 = vcombine.high %v323, %v323
    %v326 = vcombine.high %v22, %v22
    %v328 = vunpack.c.l.s4 1983009808
    %v329 = vunpack.c.0.s8 %v328
    %v330 = vlaneseq
    %v331 = vshrl.u32 %v330, 7
    %v332 = vsub.s32 %v329, %v331
    %v333 = vrot.slane %v22, %v332
    %v335 = vunpack.c.l.s4 1983009808
    %v336 = vunpack.c.0.s8 %v335
    %v337 = vlaneseq
    %v338 = vshrl.u32 %v337, 7
    %v339 = vsub.s32 %v336, %v338
    %v340 = vrot.slane %v326, %v339
    %v341 = vcombine.high %v333, %v333
    %v342 = vcombine.high %v340, %v340
    %v343 = vcombine.high %v23, %v23
    %v345 = vunpack.c.l.s4 1983009808
    %v346 = vunpack.c.0.s8 %v345
    %v347 = vlaneseq
    %v348 = vshrl.u32 %v347, 7
    %v349 = vsub.s32 %v346, %v348
    %v350 = vrot.slane %v23, %v349
    %v352 = vunpack.c.l.s4 1983009808
    %v353 = vunpack.c.0.s8 %v352
    %v354 = vlaneseq
    %v355 = vshrl.u32 %v354, 7
    %v356 = vsub.s32 %v353, %v355
    %v357 = vrot.slane %v343, %v356
    %v358 = vcombine.high %v350, %v350
    %v359 = vcombine.high %v357, %v357
    %v360 = vcombine.high %v24, %v24
    %v362 = vunpack.c.l.s4 1983009808
    %v363 = vunpack.c.0.s8 %v362
    %v364 = vlaneseq
    %v365 = vshrl.u32 %v364, 7
    %v366 = vsub.s32 %v363, %v365
    %v367 = vrot.slane %v24, %v366
    %v369 = vunpack.c.l.s4 1983009808
    %v370 = vunpack.c.0.s8 %v369
    %v371 = vlaneseq
    %v372 = vshrl.u32 %v371, 7
    %v373 = vsub.s32 %v370, %v372
    %v374 = vrot.slane %v360, %v373
    %v375 = vcombine.high %v367, %v367
    %v376 = vcombine.high %v374, %v374
    %393 = vmatprep.subr.mxu0 0.0
    %394 = vmatpush1.msra.mxu0 %v25
    %395 = vmatprep.subr.mxu0 0.0
    %396 = vmatpush1.msra.mxu0 %v26
    %397 = vmatprep.subr.mxu0 0.0
    %398 = vmatpush1.msra.mxu0 %v27
    %399 = vmatprep.subr.mxu0 0.0
    %400 = vmatpush1.msra.mxu0 %v28
    %401 = vmatprep.subr.mxu0 0.0
    %402 = vmatpush1.msra.mxu0 %v29
    %403 = vmatprep.subr.mxu0 0.0
    %404 = vmatpush1.msra.mxu0 %v30
    %405 = vmatprep.subr.mxu0 0.0
    %406 = vmatpush1.msra.mxu0 %v31
    %407 = vmatprep.subr.mxu0 0.0
    %408 = vmatpush1.msra.mxu0 %v32
    %409 = vmatprep.subr.mxu0 0.0
    %410 = vmatpush1.msra.mxu0 %v33
    %411 = vmatprep.subr.mxu0 0.0
    %412 = vmatpush1.msra.mxu0 %v34
    %413 = vmatprep.subr.mxu0 0.0
    %414 = vmatpush1.msra.mxu0 %v35
    %415 = vmatprep.subr.mxu0 0.0
    %416 = vmatpush1.msra.mxu0 %v36
    %417 = vmatprep.subr.mxu0 0.0
    %418 = vmatpush1.msra.mxu0 %v37
    %419 = vmatprep.subr.mxu0 0.0
    %420 = vmatpush1.msra.mxu0 %v38
    %421 = vmatprep.subr.mxu0 0.0
    %422 = vmatpush1.msra.mxu0 %v39
    %423 = vmatprep.subr.mxu0 0.0
    %424 = vmatpush1.msra.mxu0 %v40
    %425 = vmatprep.subr.mxu0 0.0
    %426 = vmatpush1.msra.mxu0 %v41
    %427 = vmatprep.subr.mxu0 0.0
    %428 = vmatpush1.msra.mxu0 %v42
    %429 = vmatprep.subr.mxu0 0.0
    %430 = vmatpush1.msra.mxu0 %v43
    %431 = vmatprep.subr.mxu0 0.0
    %432 = vmatpush1.msra.mxu0 %v44
    %433 = vmatprep.subr.mxu0 0.0
    %434 = vmatpush1.msra.mxu0 %v45
    %435 = vmatprep.subr.mxu0 0.0
    %436 = vmatpush1.msra.mxu0 %v46
    %437 = vmatprep.subr.mxu0 0.0
    %438 = vmatpush1.msra.mxu0 %v47
    %439 = vmatprep.subr.mxu0 0.0
    %440 = vmatpush1.msra.mxu0 %v48
    %441 = vmatprep.subr.mxu0 0.0
    %442 = vmatpush1.msra.mxu0 %v49
    %443 = vmatprep.subr.mxu0 0.0
    %444 = vmatpush1.msra.mxu0 %v50
    %445 = vmatprep.subr.mxu0 0.0
    %446 = vmatpush1.msra.mxu0 %v51
    %447 = vmatprep.subr.mxu0 0.0
    %448 = vmatpush1.msra.mxu0 %v52
    %449 = vmatprep.subr.mxu0 0.0
    %450 = vmatpush1.msra.mxu0 %v53
    %451 = vmatprep.subr.mxu0 0.0
    %452 = vmatpush1.msra.mxu0 %v54
    %453 = vmatprep.subr.mxu0 0.0
    %454 = vmatpush1.msra.mxu0 %v55
    %455 = vmatprep.subr.mxu0 0.0
    %456 = vmatpush1.msra.mxu0 %v56
    %457 = vmatprep.mubr.f32.mxu0 %v324
    %458 = vmatmul.mubr.f32.gmra.mrb[0].mxu0 %v316
    %v459 = vpop.f32.mrb[0].mxu0
    %v460 = vadd.f32 %v303, %v459
    %v461 = vpop.f32.mrb[0].mxu0
    %462 = vdwg.mxu0
    %463 = vmatprep.subr.mxu0 0.0
    %464 = vmatpush1.msra.mxu0 %v57
    %465 = vmatprep.subr.mxu0 0.0
    %466 = vmatpush1.msra.mxu0 %v58
    %467 = vmatprep.subr.mxu0 0.0
    %468 = vmatpush1.msra.mxu0 %v59
    %469 = vmatprep.subr.mxu0 0.0
    %470 = vmatpush1.msra.mxu0 %v60
    %471 = vmatprep.subr.mxu0 0.0
    %472 = vmatpush1.msra.mxu0 %v61
    %473 = vmatprep.subr.mxu0 0.0
    %474 = vmatpush1.msra.mxu0 %v62
    %475 = vmatprep.subr.mxu0 0.0
    %476 = vmatpush1.msra.mxu0 %v63
    %477 = vmatprep.subr.mxu0 0.0
    %478 = vmatpush1.msra.mxu0 %v64
    %479 = vmatprep.subr.mxu0 0.0
    %480 = vmatpush1.msra.mxu0 %v65
    %481 = vmatprep.subr.mxu0 0.0
    %482 = vmatpush1.msra.mxu0 %v66
    %483 = vmatprep.subr.mxu0 0.0
    %484 = vmatpush1.msra.mxu0 %v67
    %485 = vmatprep.subr.mxu0 0.0
    %486 = vmatpush1.msra.mxu0 %v68
    %487 = vmatprep.subr.mxu0 0.0
    %488 = vmatpush1.msra.mxu0 %v69
    %489 = vmatprep.subr.mxu0 0.0
    %490 = vmatpush1.msra.mxu0 %v70
    %491 = vmatprep.subr.mxu0 0.0
    %492 = vmatpush1.msra.mxu0 %v71
    %493 = vmatprep.subr.mxu0 0.0
    %494 = vmatpush1.msra.mxu0 %v72
    %495 = vmatprep.subr.mxu0 0.0
    %496 = vmatpush1.msra.mxu0 %v73
    %497 = vmatprep.subr.mxu0 0.0
    %498 = vmatpush1.msra.mxu0 %v74
    %499 = vmatprep.subr.mxu0 0.0
    %500 = vmatpush1.msra.mxu0 %v75
    %501 = vmatprep.subr.mxu0 0.0
    %502 = vmatpush1.msra.mxu0 %v76
    %503 = vmatprep.subr.mxu0 0.0
    %504 = vmatpush1.msra.mxu0 %v77
    %505 = vmatprep.subr.mxu0 0.0
    %506 = vmatpush1.msra.mxu0 %v78
    %507 = vmatprep.subr.mxu0 0.0
    %508 = vmatpush1.msra.mxu0 %v79
    %509 = vmatprep.subr.mxu0 0.0
    %510 = vmatpush1.msra.mxu0 %v80
    %511 = vmatprep.subr.mxu0 0.0
    %512 = vmatpush1.msra.mxu0 %v81
    %513 = vmatprep.subr.mxu0 0.0
    %514 = vmatpush1.msra.mxu0 %v82
    %515 = vmatprep.subr.mxu0 0.0
    %516 = vmatpush1.msra.mxu0 %v83
    %517 = vmatprep.subr.mxu0 0.0
    %518 = vmatpush1.msra.mxu0 %v84
    %519 = vmatprep.subr.mxu0 0.0
    %520 = vmatpush1.msra.mxu0 %v85
    %521 = vmatprep.subr.mxu0 0.0
    %522 = vmatpush1.msra.mxu0 %v86
    %523 = vmatprep.subr.mxu0 0.0
    %524 = vmatpush1.msra.mxu0 %v87
    %525 = vmatprep.subr.mxu0 0.0
    %526 = vmatpush1.msra.mxu0 %v88
    %527 = vmatprep.mubr.f32.mxu0 %v325
    %528 = vmatmul.mubr.f32.gmra.mrb[0].mxu0 %v323
    %v529 = vpop.f32.mrb[0].mxu0
    %v530 = vadd.f32 %v460, %v529
    %v531 = vpop.f32.mrb[0].mxu0
    %532 = vdwg.mxu0
    %533 = vmatprep.subr.mxu0 0.0
    %534 = vmatpush1.msra.mxu0 %v89
    %535 = vmatprep.subr.mxu0 0.0
    %536 = vmatpush1.msra.mxu0 %v90
    %537 = vmatprep.subr.mxu0 0.0
    %538 = vmatpush1.msra.mxu0 %v91
    %539 = vmatprep.subr.mxu0 0.0
    %540 = vmatpush1.msra.mxu0 %v92
    %541 = vmatprep.subr.mxu0 0.0
    %542 = vmatpush1.msra.mxu0 %v93
    %543 = vmatprep.subr.mxu0 0.0
    %544 = vmatpush1.msra.mxu0 %v94
    %545 = vmatprep.subr.mxu0 0.0
    %546 = vmatpush1.msra.mxu0 %v95
    %547 = vmatprep.subr.mxu0 0.0
    %548 = vmatpush1.msra.mxu0 %v96
    %549 = vmatprep.subr.mxu0 0.0
    %550 = vmatpush1.msra.mxu0 %v97
    %551 = vmatprep.subr.mxu0 0.0
    %552 = vmatpush1.msra.mxu0 %v98
    %553 = vmatprep.subr.mxu0 0.0
    %554 = vmatpush1.msra.mxu0 %v99
    %555 = vmatprep.subr.mxu0 0.0
    %556 = vmatpush1.msra.mxu0 %v100
    %557 = vmatprep.subr.mxu0 0.0
    %558 = vmatpush1.msra.mxu0 %v101
    %559 = vmatprep.subr.mxu0 0.0
    %560 = vmatpush1.msra.mxu0 %v102
    %561 = vmatprep.subr.mxu0 0.0
    %562 = vmatpush1.msra.mxu0 %v103
    %563 = vmatprep.subr.mxu0 0.0
    %564 = vmatpush1.msra.mxu0 %v104
    %565 = vmatprep.subr.mxu0 0.0
    %566 = vmatpush1.msra.mxu0 %v105
    %567 = vmatprep.subr.mxu0 0.0
    %568 = vmatpush1.msra.mxu0 %v106
    %569 = vmatprep.subr.mxu0 0.0
    %570 = vmatpush1.msra.mxu0 %v107
    %571 = vmatprep.subr.mxu0 0.0
    %572 = vmatpush1.msra.mxu0 %v108
    %573 = vmatprep.subr.mxu0 0.0
    %574 = vmatpush1.msra.mxu0 %v109
    %575 = vmatprep.subr.mxu0 0.0
    %576 = vmatpush1.msra.mxu0 %v110
    %577 = vmatprep.subr.mxu0 0.0
    %578 = vmatpush1.msra.mxu0 %v111
    %579 = vmatprep.subr.mxu0 0.0
    %580 = vmatpush1.msra.mxu0 %v112
    %581 = vmatprep.subr.mxu0 0.0
    %582 = vmatpush1.msra.mxu0 %v113
    %583 = vmatprep.subr.mxu0 0.0
    %584 = vmatpush1.msra.mxu0 %v114
    %585 = vmatprep.subr.mxu0 0.0
    %586 = vmatpush1.msra.mxu0 %v115
    %587 = vmatprep.subr.mxu0 0.0
    %588 = vmatpush1.msra.mxu0 %v116
    %589 = vmatprep.subr.mxu0 0.0
    %590 = vmatpush1.msra.mxu0 %v117
    %591 = vmatprep.subr.mxu0 0.0
    %592 = vmatpush1.msra.mxu0 %v118
    %593 = vmatprep.subr.mxu0 0.0
    %594 = vmatpush1.msra.mxu0 %v119
    %595 = vmatprep.subr.mxu0 0.0
    %596 = vmatpush1.msra.mxu0 %v120
    %597 = vmatprep.mubr.f32.mxu0 %v341
    %598 = vmatmul.mubr.f32.gmra.mrb[0].mxu0 %v333
    %v599 = vpop.f32.mrb[0].mxu0
    %v600 = vadd.f32 %v530, %v599
    %v601 = vpop.f32.mrb[0].mxu0
    %602 = vdwg.mxu0
    %603 = vmatprep.subr.mxu0 0.0
    %604 = vmatpush1.msra.mxu0 %v121
    %605 = vmatprep.subr.mxu0 0.0
    %606 = vmatpush1.msra.mxu0 %v122
    %607 = vmatprep.subr.mxu0 0.0
    %608 = vmatpush1.msra.mxu0 %v123
    %609 = vmatprep.subr.mxu0 0.0
    %610 = vmatpush1.msra.mxu0 %v124
    %611 = vmatprep.subr.mxu0 0.0
    %612 = vmatpush1.msra.mxu0 %v125
    %613 = vmatprep.subr.mxu0 0.0
    %614 = vmatpush1.msra.mxu0 %v126
    %615 = vmatprep.subr.mxu0 0.0
    %616 = vmatpush1.msra.mxu0 %v127
    %617 = vmatprep.subr.mxu0 0.0
    %618 = vmatpush1.msra.mxu0 %v128
    %619 = vmatprep.subr.mxu0 0.0
    %620 = vmatpush1.msra.mxu0 %v129
    %621 = vmatprep.subr.mxu0 0.0
    %622 = vmatpush1.msra.mxu0 %v130
    %623 = vmatprep.subr.mxu0 0.0
    %624 = vmatpush1.msra.mxu0 %v131
    %625 = vmatprep.subr.mxu0 0.0
    %626 = vmatpush1.msra.mxu0 %v132
    %627 = vmatprep.subr.mxu0 0.0
    %628 = vmatpush1.msra.mxu0 %v133
    %629 = vmatprep.subr.mxu0 0.0
    %630 = vmatpush1.msra.mxu0 %v134
    %631 = vmatprep.subr.mxu0 0.0
    %632 = vmatpush1.msra.mxu0 %v135
    %633 = vmatprep.subr.mxu0 0.0
    %634 = vmatpush1.msra.mxu0 %v136
    %635 = vmatprep.subr.mxu0 0.0
    %636 = vmatpush1.msra.mxu0 %v137
    %637 = vmatprep.subr.mxu0 0.0
    %638 = vmatpush1.msra.mxu0 %v138
    %639 = vmatprep.subr.mxu0 0.0
    %640 = vmatpush1.msra.mxu0 %v139
    %641 = vmatprep.subr.mxu0 0.0
    %642 = vmatpush1.msra.mxu0 %v140
    %643 = vmatprep.subr.mxu0 0.0
    %644 = vmatpush1.msra.mxu0 %v141
    %645 = vmatprep.subr.mxu0 0.0
    %646 = vmatpush1.msra.mxu0 %v142
    %647 = vmatprep.subr.mxu0 0.0
    %648 = vmatpush1.msra.mxu0 %v143
    %649 = vmatprep.subr.mxu0 0.0
    %650 = vmatpush1.msra.mxu0 %v144
    %651 = vmatprep.subr.mxu0 0.0
    %652 = vmatpush1.msra.mxu0 %v145
    %653 = vmatprep.subr.mxu0 0.0
    %654 = vmatpush1.msra.mxu0 %v146
    %655 = vmatprep.subr.mxu0 0.0
    %656 = vmatpush1.msra.mxu0 %v147
    %657 = vmatprep.subr.mxu0 0.0
    %658 = vmatpush1.msra.mxu0 %v148
    %659 = vmatprep.subr.mxu0 0.0
    %660 = vmatpush1.msra.mxu0 %v149
    %661 = vmatprep.subr.mxu0 0.0
    %662 = vmatpush1.msra.mxu0 %v150
    %663 = vmatprep.subr.mxu0 0.0
    %664 = vmatpush1.msra.mxu0 %v151
    %665 = vmatprep.subr.mxu0 0.0
    %666 = vmatpush1.msra.mxu0 %v152
    %667 = vmatprep.mubr.f32.mxu0 %v342
    %668 = vmatmul.mubr.f32.gmra.mrb[0].mxu0 %v340
    %v669 = vpop.f32.mrb[0].mxu0
    %v670 = vadd.f32 %v600, %v669
    %v671 = vpop.f32.mrb[0].mxu0
    %672 = vdwg.mxu0
    %673 = vmatprep.subr.mxu0 0.0
    %674 = vmatpush1.msra.mxu0 %v153
    %675 = vmatprep.subr.mxu0 0.0
    %676 = vmatpush1.msra.mxu0 %v154
    %677 = vmatprep.subr.mxu0 0.0
    %678 = vmatpush1.msra.mxu0 %v155
    %679 = vmatprep.subr.mxu0 0.0
    %680 = vmatpush1.msra.mxu0 %v156
    %681 = vmatprep.subr.mxu0 0.0
    %682 = vmatpush1.msra.mxu0 %v157
    %683 = vmatprep.subr.mxu0 0.0
    %684 = vmatpush1.msra.mxu0 %v158
    %685 = vmatprep.subr.mxu0 0.0
    %686 = vmatpush1.msra.mxu0 %v159
    %687 = vmatprep.subr.mxu0 0.0
    %688 = vmatpush1.msra.mxu0 %v160
    %689 = vmatprep.subr.mxu0 0.0
    %690 = vmatpush1.msra.mxu0 %v161
    %691 = vmatprep.subr.mxu0 0.0
    %692 = vmatpush1.msra.mxu0 %v162
    %693 = vmatprep.subr.mxu0 0.0
    %694 = vmatpush1.msra.mxu0 %v163
    %695 = vmatprep.subr.mxu0 0.0
    %696 = vmatpush1.msra.mxu0 %v164
    %697 = vmatprep.subr.mxu0 0.0
    %698 = vmatpush1.msra.mxu0 %v165
    %699 = vmatprep.subr.mxu0 0.0
    %700 = vmatpush1.msra.mxu0 %v166
    %701 = vmatprep.subr.mxu0 0.0
    %702 = vmatpush1.msra.mxu0 %v167
    %703 = vmatprep.subr.mxu0 0.0
    %704 = vmatpush1.msra.mxu0 %v168
    %705 = vmatprep.subr.mxu0 0.0
    %706 = vmatpush1.msra.mxu0 %v169
    %707 = vmatprep.subr.mxu0 0.0
    %708 = vmatpush1.msra.mxu0 %v170
    %709 = vmatprep.subr.mxu0 0.0
    %710 = vmatpush1.msra.mxu0 %v171
    %711 = vmatprep.subr.mxu0 0.0
    %712 = vmatpush1.msra.mxu0 %v172
    %713 = vmatprep.subr.mxu0 0.0
    %714 = vmatpush1.msra.mxu0 %v173
    %715 = vmatprep.subr.mxu0 0.0
    %716 = vmatpush1.msra.mxu0 %v174
    %717 = vmatprep.subr.mxu0 0.0
    %718 = vmatpush1.msra.mxu0 %v175
    %719 = vmatprep.subr.mxu0 0.0
    %720 = vmatpush1.msra.mxu0 %v176
    %721 = vmatprep.subr.mxu0 0.0
    %722 = vmatpush1.msra.mxu0 %v177
    %723 = vmatprep.subr.mxu0 0.0
    %724 = vmatpush1.msra.mxu0 %v178
    %725 = vmatprep.subr.mxu0 0.0
    %726 = vmatpush1.msra.mxu0 %v179
    %727 = vmatprep.subr.mxu0 0.0
    %728 = vmatpush1.msra.mxu0 %v180
    %729 = vmatprep.subr.mxu0 0.0
    %730 = vmatpush1.msra.mxu0 %v181
    %731 = vmatprep.subr.mxu0 0.0
    %732 = vmatpush1.msra.mxu0 %v182
    %733 = vmatprep.subr.mxu0 0.0
    %734 = vmatpush1.msra.mxu0 %v183
    %735 = vmatprep.subr.mxu0 0.0
    %736 = vmatpush1.msra.mxu0 %v184
    %737 = vmatprep.mubr.f32.mxu0 %v358
    %738 = vmatmul.mubr.f32.gmra.mrb[0].mxu0 %v350
    %v739 = vpop.f32.mrb[0].mxu0
    %v740 = vadd.f32 %v670, %v739
    %v741 = vpop.f32.mrb[0].mxu0
    %742 = vdwg.mxu0
    %743 = vmatprep.subr.mxu0 0.0
    %744 = vmatpush1.msra.mxu0 %v185
    %745 = vmatprep.subr.mxu0 0.0
    %746 = vmatpush1.msra.mxu0 %v186
    %747 = vmatprep.subr.mxu0 0.0
    %748 = vmatpush1.msra.mxu0 %v187
    %749 = vmatprep.subr.mxu0 0.0
    %750 = vmatpush1.msra.mxu0 %v188
    %751 = vmatprep.subr.mxu0 0.0
    %752 = vmatpush1.msra.mxu0 %v189
    %753 = vmatprep.subr.mxu0 0.0
    %754 = vmatpush1.msra.mxu0 %v190
    %755 = vmatprep.subr.mxu0 0.0
    %756 = vmatpush1.msra.mxu0 %v191
    %757 = vmatprep.subr.mxu0 0.0
    %758 = vmatpush1.msra.mxu0 %v192
    %759 = vmatprep.subr.mxu0 0.0
    %760 = vmatpush1.msra.mxu0 %v193
    %761 = vmatprep.subr.mxu0 0.0
    %762 = vmatpush1.msra.mxu0 %v194
    %763 = vmatprep.subr.mxu0 0.0
    %764 = vmatpush1.msra.mxu0 %v195
    %765 = vmatprep.subr.mxu0 0.0
    %766 = vmatpush1.msra.mxu0 %v196
    %767 = vmatprep.subr.mxu0 0.0
    %768 = vmatpush1.msra.mxu0 %v197
    %769 = vmatprep.subr.mxu0 0.0
    %770 = vmatpush1.msra.mxu0 %v198
    %771 = vmatprep.subr.mxu0 0.0
    %772 = vmatpush1.msra.mxu0 %v199
    %773 = vmatprep.subr.mxu0 0.0
    %774 = vmatpush1.msra.mxu0 %v200
    %775 = vmatprep.subr.mxu0 0.0
    %776 = vmatpush1.msra.mxu0 %v201
    %777 = vmatprep.subr.mxu0 0.0
    %778 = vmatpush1.msra.mxu0 %v202
    %779 = vmatprep.subr.mxu0 0.0
    %780 = vmatpush1.msra.mxu0 %v203
    %781 = vmatprep.subr.mxu0 0.0
    %782 = vmatpush1.msra.mxu0 %v204
    %783 = vmatprep.subr.mxu0 0.0
    %784 = vmatpush1.msra.mxu0 %v205
    %785 = vmatprep.subr.mxu0 0.0
    %786 = vmatpush1.msra.mxu0 %v206
    %787 = vmatprep.subr.mxu0 0.0
    %788 = vmatpush1.msra.mxu0 %v207
    %789 = vmatprep.subr.mxu0 0.0
    %790 = vmatpush1.msra.mxu0 %v208
    %791 = vmatprep.subr.mxu0 0.0
    %792 = vmatpush1.msra.mxu0 %v209
    %793 = vmatprep.subr.mxu0 0.0
    %794 = vmatpush1.msra.mxu0 %v210
    %795 = vmatprep.subr.mxu0 0.0
    %796 = vmatpush1.msra.mxu0 %v211
    %797 = vmatprep.subr.mxu0 0.0
    %798 = vmatpush1.msra.mxu0 %v212
    %799 = vmatprep.subr.mxu0 0.0
    %800 = vmatpush1.msra.mxu0 %v213
    %801 = vmatprep.subr.mxu0 0.0
    %802 = vmatpush1.msra.mxu0 %v214
    %803 = vmatprep.subr.mxu0 0.0
    %804 = vmatpush1.msra.mxu0 %v215
    %805 = vmatprep.subr.mxu0 0.0
    %806 = vmatpush1.msra.mxu0 %v216
    %807 = vmatprep.mubr.f32.mxu0 %v359
    %808 = vmatmul.mubr.f32.gmra.mrb[0].mxu0 %v357
    %v809 = vpop.f32.mrb[0].mxu0
    %v810 = vadd.f32 %v740, %v809
    %v811 = vpop.f32.mrb[0].mxu0
    %812 = vdwg.mxu0
    %813 = vmatprep.subr.mxu0 0.0
    %814 = vmatpush1.msra.mxu0 %v217
    %815 = vmatprep.subr.mxu0 0.0
    %816 = vmatpush1.msra.mxu0 %v218
    %817 = vmatprep.subr.mxu0 0.0
    %818 = vmatpush1.msra.mxu0 %v219
    %819 = vmatprep.subr.mxu0 0.0
    %820 = vmatpush1.msra.mxu0 %v220
    %821 = vmatprep.subr.mxu0 0.0
    %822 = vmatpush1.msra.mxu0 %v221
    %823 = vmatprep.subr.mxu0 0.0
    %824 = vmatpush1.msra.mxu0 %v222
    %825 = vmatprep.subr.mxu0 0.0
    %826 = vmatpush1.msra.mxu0 %v223
    %827 = vmatprep.subr.mxu0 0.0
    %828 = vmatpush1.msra.mxu0 %v224
    %829 = vmatprep.subr.mxu0 0.0
    %830 = vmatpush1.msra.mxu0 %v225
    %831 = vmatprep.subr.mxu0 0.0
    %832 = vmatpush1.msra.mxu0 %v226
    %833 = vmatprep.subr.mxu0 0.0
    %834 = vmatpush1.msra.mxu0 %v227
    %835 = vmatprep.subr.mxu0 0.0
    %836 = vmatpush1.msra.mxu0 %v228
    %837 = vmatprep.subr.mxu0 0.0
    %838 = vmatpush1.msra.mxu0 %v229
    %839 = vmatprep.subr.mxu0 0.0
    %840 = vmatpush1.msra.mxu0 %v230
    %841 = vmatprep.subr.mxu0 0.0
    %842 = vmatpush1.msra.mxu0 %v231
    %843 = vmatprep.subr.mxu0 0.0
    %844 = vmatpush1.msra.mxu0 %v232
    %845 = vmatprep.subr.mxu0 0.0
    %846 = vmatpush1.msra.mxu0 %v233
    %847 = vmatprep.subr.mxu0 0.0
    %848 = vmatpush1.msra.mxu0 %v234
    %849 = vmatprep.subr.mxu0 0.0
    %850 = vmatpush1.msra.mxu0 %v235
    %851 = vmatprep.subr.mxu0 0.0
    %852 = vmatpush1.msra.mxu0 %v236
    %853 = vmatprep.subr.mxu0 0.0
    %854 = vmatpush1.msra.mxu0 %v237
    %855 = vmatprep.subr.mxu0 0.0
    %856 = vmatpush1.msra.mxu0 %v238
    %857 = vmatprep.subr.mxu0 0.0
    %858 = vmatpush1.msra.mxu0 %v239
    %859 = vmatprep.subr.mxu0 0.0
    %860 = vmatpush1.msra.mxu0 %v240
    %861 = vmatprep.subr.mxu0 0.0
    %862 = vmatpush1.msra.mxu0 %v241
    %863 = vmatprep.subr.mxu0 0.0
    %864 = vmatpush1.msra.mxu0 %v242
    %865 = vmatprep.subr.mxu0 0.0
    %866 = vmatpush1.msra.mxu0 %v243
    %867 = vmatprep.subr.mxu0 0.0
    %868 = vmatpush1.msra.mxu0 %v244
    %869 = vmatprep.subr.mxu0 0.0
    %870 = vmatpush1.msra.mxu0 %v245
    %871 = vmatprep.subr.mxu0 0.0
    %872 = vmatpush1.msra.mxu0 %v246
    %873 = vmatprep.subr.mxu0 0.0
    %874 = vmatpush1.msra.mxu0 %v247
    %875 = vmatprep.subr.mxu0 0.0
    %876 = vmatpush1.msra.mxu0 %v248
    %877 = vmatprep.mubr.f32.mxu0 %v375
    %878 = vmatmul.mubr.f32.gmra.mrb[0].mxu0 %v367
    %v879 = vpop.f32.mrb[0].mxu0
    %v880 = vadd.f32 %v810, %v879
    %v881 = vpop.f32.mrb[0].mxu0
    %882 = vdwg.mxu0
    %883 = vmatprep.subr.mxu0 0.0
    %884 = vmatpush1.msra.mxu0 %v249
    %885 = vmatprep.subr.mxu0 0.0
    %886 = vmatpush1.msra.mxu0 %v250
    %887 = vmatprep.subr.mxu0 0.0
    %888 = vmatpush1.msra.mxu0 %v251
    %889 = vmatprep.subr.mxu0 0.0
    %890 = vmatpush1.msra.mxu0 %v252
    %891 = vmatprep.subr.mxu0 0.0
    %892 = vmatpush1.msra.mxu0 %v253
    %893 = vmatprep.subr.mxu0 0.0
    %894 = vmatpush1.msra.mxu0 %v254
    %895 = vmatprep.subr.mxu0 0.0
    %896 = vmatpush1.msra.mxu0 %v255
    %897 = vmatprep.subr.mxu0 0.0
    %898 = vmatpush1.msra.mxu0 %v256
    %899 = vmatprep.subr.mxu0 0.0
    %900 = vmatpush1.msra.mxu0 %v257
    %901 = vmatprep.subr.mxu0 0.0
    %902 = vmatpush1.msra.mxu0 %v258
    %903 = vmatprep.subr.mxu0 0.0
    %904 = vmatpush1.msra.mxu0 %v259
    %905 = vmatprep.subr.mxu0 0.0
    %906 = vmatpush1.msra.mxu0 %v260
    %907 = vmatprep.subr.mxu0 0.0
    %908 = vmatpush1.msra.mxu0 %v261
    %909 = vmatprep.subr.mxu0 0.0
    %910 = vmatpush1.msra.mxu0 %v262
    %911 = vmatprep.subr.mxu0 0.0
    %912 = vmatpush1.msra.mxu0 %v263
    %913 = vmatprep.subr.mxu0 0.0
    %914 = vmatpush1.msra.mxu0 %v264
    %915 = vmatprep.subr.mxu0 0.0
    %916 = vmatpush1.msra.mxu0 %v265
    %917 = vmatprep.subr.mxu0 0.0
    %918 = vmatpush1.msra.mxu0 %v266
    %919 = vmatprep.subr.mxu0 0.0
    %920 = vmatpush1.msra.mxu0 %v267
    %921 = vmatprep.subr.mxu0 0.0
    %922 = vmatpush1.msra.mxu0 %v268
    %923 = vmatprep.subr.mxu0 0.0
    %924 = vmatpush1.msra.mxu0 %v269
    %925 = vmatprep.subr.mxu0 0.0
    %926 = vmatpush1.msra.mxu0 %v270
    %927 = vmatprep.subr.mxu0 0.0
    %928 = vmatpush1.msra.mxu0 %v271
    %929 = vmatprep.subr.mxu0 0.0
    %930 = vmatpush1.msra.mxu0 %v272
    %931 = vmatprep.subr.mxu0 0.0
    %932 = vmatpush1.msra.mxu0 %v273
    %933 = vmatprep.subr.mxu0 0.0
    %934 = vmatpush1.msra.mxu0 %v274
    %935 = vmatprep.subr.mxu0 0.0
    %936 = vmatpush1.msra.mxu0 %v275
    %937 = vmatprep.subr.mxu0 0.0
    %938 = vmatpush1.msra.mxu0 %v276
    %939 = vmatprep.subr.mxu0 0.0
    %940 = vmatpush1.msra.mxu0 %v277
    %941 = vmatprep.subr.mxu0 0.0
    %942 = vmatpush1.msra.mxu0 %v278
    %943 = vmatprep.subr.mxu0 0.0
    %944 = vmatpush1.msra.mxu0 %v279
    %945 = vmatprep.subr.mxu0 0.0
    %946 = vmatpush1.msra.mxu0 %v280
    %947 = vmatprep.mubr.f32.mxu0 %v376
    %948 = vmatmul.mubr.f32.gmra.mrb[0].mxu0 %v374
    %v949 = vpop.f32.mrb[0].mxu0
    %v950 = vadd.f32 %v880, %v949
    %v951 = vpop.f32.mrb[0].mxu0
    %952 = vdwg.mxu0
    %v954 = vlaneseq
    %v955 = vshrl.u32 %v954, 7
    %v956 = vsub.s32 0, %v955
    %v957 = vrot.slane %v298, %v956
    %959 = vmatprep.subr.mxu0 0.0
    %960 = vmatpush1.msra.mxu0 %v282
    %961 = vmatprep.subr.mxu0 0.0
    %962 = vmatpush1.msra.mxu0 %v283
    %963 = vmatprep.subr.mxu0 0.0
    %964 = vmatpush1.msra.mxu0 %v284
    %965 = vmatprep.subr.mxu0 0.0
    %966 = vmatpush1.msra.mxu0 %v285
    %967 = vmatprep.subr.mxu0 0.0
    %968 = vmatpush1.msra.mxu0 %v286
    %969 = vmatprep.subr.mxu0 0.0
    %970 = vmatpush1.msra.mxu0 %v287
    %971 = vmatprep.subr.mxu0 0.0
    %972 = vmatpush1.msra.mxu0 %v288
    %973 = vmatprep.subr.mxu0 0.0
    %974 = vmatpush1.msra.mxu0 %v289
    %975 = vmatprep.subr.mxu0 0.0
    %976 = vmatpush1.msra.mxu0 %v290
    %977 = vmatprep.subr.mxu0 0.0
    %978 = vmatpush1.msra.mxu0 %v291
    %979 = vmatprep.subr.mxu0 0.0
    %980 = vmatpush1.msra.mxu0 %v292
    %981 = vmatprep.subr.mxu0 0.0
    %982 = vmatpush1.msra.mxu0 %v293
    %983 = vmatprep.subr.mxu0 0.0
    %984 = vmatpush1.msra.mxu0 %v294
    %985 = vmatprep.subr.mxu0 0.0
    %986 = vmatpush1.msra.mxu0 %v295
    %987 = vmatprep.subr.mxu0 0.0
    %988 = vmatpush1.msra.mxu0 %v296
    %989 = vmatprep.subr.mxu0 0.0
    %990 = vmatpush1.msra.mxu0 %v297
    %991 = vmatprep.subr.mxu0 0.0
    %992 = vmatpush1.msra.mxu0 0.0
    %993 = vmatprep.subr.mxu0 0.0
    %994 = vmatpush1.msra.mxu0 0.0
    %995 = vmatprep.subr.mxu0 0.0
    %996 = vmatpush1.msra.mxu0 0.0
    %997 = vmatprep.subr.mxu0 0.0
    %998 = vmatpush1.msra.mxu0 0.0
    %999 = vmatprep.subr.mxu0 0.0
    %1000 = vmatpush1.msra.mxu0 0.0
    %1001 = vmatprep.subr.mxu0 0.0
    %1002 = vmatpush1.msra.mxu0 0.0
    %1003 = vmatprep.subr.mxu0 0.0
    %1004 = vmatpush1.msra.mxu0 0.0
    %1005 = vmatprep.subr.mxu0 0.0
    %1006 = vmatpush1.msra.mxu0 0.0
    %1007 = vmatprep.subr.mxu0 0.0
    %1008 = vmatpush1.msra.mxu0 0.0
    %1009 = vmatprep.subr.mxu0 0.0
    %1010 = vmatpush1.msra.mxu0 0.0
    %1011 = vmatprep.subr.mxu0 0.0
    %1012 = vmatpush1.msra.mxu0 0.0
    %1013 = vmatprep.subr.mxu0 0.0
    %1014 = vmatpush1.msra.mxu0 0.0
    %1015 = vmatprep.subr.mxu0 0.0
    %1016 = vmatpush1.msra.mxu0 0.0
    %1017 = vmatprep.subr.mxu0 0.0
    %1018 = vmatpush1.msra.mxu0 0.0
    %1019 = vmatprep.subr.mxu0 0.0
    %1020 = vmatpush1.msra.mxu0 0.0
    %1021 = vmatprep.subr.mxu0 0.0
    %1022 = vmatpush1.msra.mxu0 0.0
    %1023 = vmatprep.mubr.f32.mxu0 0.0
    %1024 = vmatmul.mubr.f32.gmra.mrb[0].mxu0 %v950
    %v1025 = vpop.f32.mrb[0].mxu0
    %v1026 = vadd.f32 %v957, %v1025
    %v1027 = vpop.f32.mrb[0].mxu0
    %1028 = vdwg.mxu0
    %vm1029 = vcmask 74752
    %1030 = vst.msk [vmem:[#allocation2] sm:$0x3] %vm1029, %v1026
    // Predicated region
    $region22: #{_lambda_.3} parent=1 // pred_check
      _
    $region23: #{_lambda_.3} parent=1 // pred_check_branch
      %1032 = sbr.rel (0) target = $region25
    $region24: #{_lambda_.3} parent=1 // pred_region
      %s1034 = ssub.s32 32, 32
      %1035 = vsyncadd [#allocation3], %s1034
      %s1037 = sshll.u32 [#allocation2], 4
      %s1038 = int_to_ptr.vmem [resolvable:$true] %s1037
      %1040 = dma.vmem_to_hbm [thread:$0]  %s1038, 32, %s5, [#allocation3]
    $region25: #{_lambda_.3} parent=1 // pred_fallthru
      _
    // Predicated region
    $region26: #{_lambda_.3} parent=1 // pred_check
      _
    $region27: #{_lambda_.3} parent=1 // pred_check_branch
      %1042 = sbr.rel (0) target = $region29
    $region28: #{_lambda_.3} parent=1 // pred_region
      %1043 = dma.done [#allocation3], 32
    $region29: #{_lambda_.3} parent=1 // pred_fallthru
      _
    %1044 = vsyncpa [#allocation3], 1

</llo_original>
